<compile_context>
chip_gen: v5e
topology: v5e:2x2
jax: 0.10.0
libtpu: 0.0.40
codegen_flags: <defaults>
</compile_context>

<pallas_src>
import math
import functools

import jax
import jax.numpy as jnp
from jax import lax
from jax.experimental import pallas as pl
from jax.experimental.pallas import tpu as pltpu


def _round_up(a, b):
    return (a + b - 1) // b * b


def _mha_kernel(x_ref, mask_ref,
                wq_ref, bq_ref, wk_ref, bk_ref, wv_ref, bv_ref,
                wo_ref, bo_ref, gamma_ref, beta_ref,
                o_ref,
                kT_scr, v_scr, ctx_scr,
                *, n_heads, head_dim, tq, ln_eps):
    # x_ref:    (S, H)  f32, full (padded) sequence of the current batch element
    # mask_ref: (1, S) or (tq, S) additive f32 mask (broadcast-added to scores)
    # weights:  (H, H)  bf16, already in (in, out) layout; 1/sqrt(d) folded into wq
    # biases / gamma / beta: (1, H) f32
    # kT_scr:   (H, S)  bf16 scratch  (K^T, resident across q-tiles of a batch elem)
    # v_scr:    (S, H)  bf16 scratch
    # ctx_scr:  (tq, H) f32 scratch   (per-tile context accumulator)
    qi = pl.program_id(1)

    # ---- K/V projections: once per batch element, kept resident in VMEM ----
    # TODO(synk): the qi==0 step does ~3x the work of later q-tiles; a dedicated
    # projection pre-pass would even out the software pipeline.
    @pl.when(qi == 0)
    def _():
        x_all = x_ref[...].astype(jnp.bfloat16)                        # (S, H)
        k = jnp.dot(x_all, wk_ref[...],
                    preferred_element_type=jnp.float32) + bk_ref[...]
        v = jnp.dot(x_all, wv_ref[...],
                    preferred_element_type=jnp.float32) + bv_ref[...]
        kT_scr[...] = k.astype(jnp.bfloat16).T     # single XLU transpose / batch elem
        v_scr[...] = v.astype(jnp.bfloat16)

    # ---- Query tile ----
    qs = pl.multiple_of(qi * tq, tq)
    x_tile = x_ref[pl.ds(qs, tq), :]                                   # (tq, H) f32
    q = jnp.dot(x_tile.astype(jnp.bfloat16), wq_ref[...],
                preferred_element_type=jnp.float32) + bq_ref[...]
    q = q.astype(jnp.bfloat16)                  # 1/sqrt(d) already folded into wq/bq

    mask = mask_ref[...]                                               # (1|tq, S) f32

    # ---- Per-head attention; lane-dense 2-D slices, results stored immediately ----
    # (For head_dim=64 on v6e/v7x a (n_heads,tq,d) batched dot would fill the MXU
    #  better; tq>=256 amortizes MXU weight loads in the meantime.)
    for h in range(n_heads):
        lo = h * head_dim
        hi = lo + head_dim
        qh = q[:, lo:hi]                                               # (tq, d) bf16
        kht = kT_scr[lo:hi, :]                                         # (d,  S) bf16
        vh = v_scr[:, lo:hi]                                           # (S,  d) bf16

        s = jnp.dot(qh, kht, preferred_element_type=jnp.float32) + mask   # (tq, S)
        m = jnp.max(s, axis=-1, keepdims=True)
        e = jnp.exp(s - m)
        l = jnp.sum(e, axis=-1, keepdims=True)
        p = (e * pl.reciprocal(l, approx=True)).astype(jnp.bfloat16)   # EUP divide
        # (attn_dropout is identity in eval mode)
        ctx_scr[:, lo:hi] = jnp.dot(p, vh, preferred_element_type=jnp.float32)

    # ---- Output projection + residual + LayerNorm (out_dropout = identity) ----
    out = jnp.dot(ctx_scr[...].astype(jnp.bfloat16), wo_ref[...],
                  preferred_element_type=jnp.float32) + bo_ref[...]
    hid = out + x_tile
    mean = jnp.mean(hid, axis=-1, keepdims=True)
    cent = hid - mean
    var = jnp.mean(cent * cent, axis=-1, keepdims=True)
    rstd = lax.rsqrt(var + ln_eps)
    y = cent * (rstd * gamma_ref[...]) + beta_ref[...]                 # fused rstd*gamma
    o_ref[...] = y.astype(o_ref.dtype)


def prepare_params(params, *, n_heads):
    """One-time conversion of PyTorch-style params to kernel layout.

    Linear weights (out, in) -> (in, out) bf16 MXU operands; biases and LayerNorm
    affine stay f32 as (1, H) rows.  1/sqrt(head_dim) is folded into wq/bq here so
    no per-tile scale multiply runs in the kernel.
    """
    H = params['wq'].shape[0]
    scale = 1.0 / math.sqrt(H // n_heads)
    as_w = lambda w: jnp.asarray(w, jnp.float32).T.astype(jnp.bfloat16)
    as_v = lambda v: jnp.asarray(v, jnp.float32).reshape(1, H)
    return {
        'wq': (jnp.asarray(params['wq'], jnp.float32) * scale).T.astype(jnp.bfloat16),
        'bq': (jnp.asarray(params['bq'], jnp.float32) * scale).reshape(1, H),
        'wk': as_w(params['wk']), 'bk': as_v(params['bk']),
        'wv': as_w(params['wv']), 'bv': as_v(params['bv']),
        'wo': as_w(params['wo']), 'bo': as_v(params['bo']),
        'ln_gamma': as_v(params['ln_gamma']), 'ln_beta': as_v(params['ln_beta']),
    }


def _invariant_spec(shape):
    """Grid-invariant operand: constant index_map + single buffer (no double-buffer)."""
    buffered = getattr(pl, "Buffered", None)
    if buffered is not None:
        try:
            return pl.BlockSpec(shape, lambda b, qi: (0, 0), pipeline_mode=buffered(1))
        except TypeError:
            pass
    return pl.BlockSpec(shape, lambda b, qi: (0, 0))


def multi_head_attention(x, attention_mask, kparams, *, n_heads, ln_eps, q_tile=256):
    """x: (B, S, H) f32; attention_mask: additive (B|1, 1, S|1, S) head-invariant mask;
    kparams: output of prepare_params()."""
    B, S, H = x.shape
    head_dim = H // n_heads

    # ---- Query-tile / padding selection (no tq=S fallback for large ragged S) ----
    if S >= q_tile:
        tq = q_tile
        S_pad = _round_up(S, tq)
    else:
        S_pad = _round_up(S, 8)
        tq = S_pad
    n_q = S_pad // tq
    x_p = x if S_pad == S else jnp.pad(x, ((0, 0), (0, S_pad - S), (0, 0)))

    # ---- Mask: keep natural broadcast form (no O(S^2) materialization) ----
    m = jnp.asarray(attention_mask, jnp.float32)
    assert m.ndim == 4 and m.shape[1] == 1, (
        "attention_mask must be a head-invariant additive mask of shape (B|1,1,S|1,S)")
    key_only = (m.shape[2] == 1)
    qdim = 1 if key_only else S
    m = jnp.broadcast_to(m, (B, 1, qdim, S)).reshape(B, qdim, S)
    if S_pad != S:
        # padded key columns masked out; padded query rows (full-mask case) are discarded
        m = jnp.concatenate([m, jnp.full((B, qdim, S_pad - S), -1e9, m.dtype)], axis=-1)
        if not key_only:
            m = jnp.concatenate(
                [m, jnp.zeros((B, S_pad - S, S_pad), m.dtype)], axis=1)
    if key_only:
        mask_spec = pl.BlockSpec((None, 1, S_pad), lambda b, qi: (b, 0, 0))
    else:
        mask_spec = pl.BlockSpec((None, tq, S_pad), lambda b, qi: (b, qi, 0))

    kernel = functools.partial(_mha_kernel, n_heads=n_heads, head_dim=head_dim,
                               tq=tq, ln_eps=ln_eps)

    w_spec = _invariant_spec((H, H))
    v_spec = _invariant_spec((1, H))
    # x changes with b, so keep default double-buffering for safe DMA/compute overlap.
    x_spec = pl.BlockSpec((None, S_pad, H), lambda b, qi: (b, 0, 0))

    # ---- Generation-aware VMEM budget (v5e/v6e: 128 MiB, v7x: 64 MiB/TC) ----
    try:
        cap = pltpu.get_tpu_info().vmem_capacity_bytes
        vmem_limit = int(min((cap * 3) // 4, 100 * 1024 * 1024))
    except Exception:
        vmem_limit = 48 * 1024 * 1024

    out = pl.pallas_call(
        kernel,
        out_shape=jax.ShapeDtypeStruct((B, S_pad, H), x.dtype),
        grid_spec=pltpu.PrefetchScalarGridSpec(
            num_scalar_prefetch=0,
            grid=(B, n_q),
            in_specs=[
                x_spec,            # x: full (padded) sequence, revisited across q-tiles
                mask_spec,         # mask: (1,S) key mask or (tq,S) rows
                w_spec, v_spec,    # wq, bq
                w_spec, v_spec,    # wk, bk
                w_spec, v_spec,    # wv, bv
                w_spec, v_spec,    # wo, bo
                v_spec, v_spec,    # gamma, beta
            ],
            out_specs=pl.BlockSpec((None, tq, H), lambda b, qi: (b, qi, 0)),
            scratch_shapes=[
                pltpu.VMEM((H, S_pad), jnp.bfloat16),   # K^T (resident per batch elem)
                pltpu.VMEM((S_pad, H), jnp.bfloat16),   # V
                pltpu.VMEM((tq, H), jnp.float32),       # per-tile context accumulator
            ],
        ),
        compiler_params=pltpu.CompilerParams(
            dimension_semantics=("parallel", "arbitrary"),
            vmem_limit_bytes=vmem_limit),
    )(x_p, m,
      kparams['wq'], kparams['bq'], kparams['wk'], kparams['bk'],
      kparams['wv'], kparams['bv'], kparams['wo'], kparams['bo'],
      kparams['ln_gamma'], kparams['ln_beta'])

    return out[:, :S, :] if S_pad != S else out


def _reference(x, attention_mask, params, *, n_heads, ln_eps):
    """Pure-JAX f32 reference mirroring the PyTorch forward (eval mode)."""
    B, S, H = x.shape
    d = H // n_heads
    q = x @ params['wq'].T + params['bq']
    k = x @ params['wk'].T + params['bk']
    v = x @ params['wv'].T + params['bv']
    q = q.reshape(B, S, n_heads, d).transpose(0, 2, 1, 3)
    k = k.reshape(B, S, n_heads, d).transpose(0, 2, 3, 1)
    v = v.reshape(B, S, n_heads, d).transpose(0, 2, 1, 3)
    scores = jnp.matmul(q, k) / math.sqrt(d) + attention_mask
    probs = jax.nn.softmax(scores, axis=-1)
    ctx = jnp.matmul(probs, v).transpose(0, 2, 1, 3).reshape(B, S, H)
    out = ctx @ params['wo'].T + params['bo']
    h = out + x
    mean = jnp.mean(h, axis=-1, keepdims=True)
    var = jnp.mean((h - mean) ** 2, axis=-1, keepdims=True)
    return (h - mean) / jnp.sqrt(var + ln_eps) * params['ln_gamma'] + params['ln_beta']


if __name__ == "__main__":
    B, S, H = 2, 8, 32
    N_HEADS = 4
    LN_EPS = 1e-12

    key = jax.random.PRNGKey(0)
    ks = jax.random.split(key, 12)
    bound = 1.0 / math.sqrt(H)  # nn.Linear default init range
    params = {
        'wq': jax.random.uniform(ks[0], (H, H), jnp.float32, -bound, bound),
        'bq': jax.random.uniform(ks[1], (H,), jnp.float32, -bound, bound),
        'wk': jax.random.uniform(ks[2], (H, H), jnp.float32, -bound, bound),
        'bk': jax.random.uniform(ks[3], (H,), jnp.float32, -bound, bound),
        'wv': jax.random.uniform(ks[4], (H, H), jnp.float32, -bound, bound),
        'bv': jax.random.uniform(ks[5], (H,), jnp.float32, -bound, bound),
        'wo': jax.random.uniform(ks[6], (H, H), jnp.float32, -bound, bound),
        'bo': jax.random.uniform(ks[7], (H,), jnp.float32, -bound, bound),
        'ln_gamma': jnp.ones((H,), jnp.float32),
        'ln_beta': jnp.zeros((H,), jnp.float32),
    }

    x = jax.random.normal(ks[8], (B, S, H), jnp.float32)
    # Additive key-only attention mask in its natural broadcast shape (B, 1, 1, S):
    # 0 = keep, -10000 = masked (last 2 key positions).
    keep = jnp.concatenate(
        [jnp.zeros((S - 2,), jnp.float32), jnp.full((2,), -10000.0, jnp.float32)])
    attention_mask = jnp.broadcast_to(keep[None, None, None, :], (B, 1, 1, S))

    kparams = prepare_params(params, n_heads=N_HEADS)   # one-time layout conversion

    out = multi_head_attention(x, attention_mask, kparams,
                               n_heads=N_HEADS, ln_eps=LN_EPS)
    out = jax.block_until_ready(out)

    ref = _reference(x, attention_mask, params, n_heads=N_HEADS, ln_eps=LN_EPS)
    assert out.shape == (B, S, H)
    # bf16 MXU operands + approx EUP reciprocal => looser tolerance than pure f32.
    assert jnp.allclose(out, ref, atol=3e-2, rtol=3e-2), (
        "mismatch vs reference, max abs diff = %g" % float(jnp.max(jnp.abs(out - ref))))

    print("KERNEL_OK")
</pallas_src>

<mosaic_0001>
module attributes {stable_mosaic.version = 11 : i64} {
  func.func @_mha_kernel(%arg0: i32, %arg1: i32, %arg2: memref<1x8x32xf32, #tpu.memory_space<vmem>>, %arg3: memref<1x1x8xf32, #tpu.memory_space<vmem>>, %arg4: memref<32x32xbf16, #tpu.memory_space<vmem>>, %arg5: memref<1x32xf32, #tpu.memory_space<vmem>>, %arg6: memref<32x32xbf16, #tpu.memory_space<vmem>>, %arg7: memref<1x32xf32, #tpu.memory_space<vmem>>, %arg8: memref<32x32xbf16, #tpu.memory_space<vmem>>, %arg9: memref<1x32xf32, #tpu.memory_space<vmem>>, %arg10: memref<32x32xbf16, #tpu.memory_space<vmem>>, %arg11: memref<1x32xf32, #tpu.memory_space<vmem>>, %arg12: memref<1x32xf32, #tpu.memory_space<vmem>>, %arg13: memref<1x32xf32, #tpu.memory_space<vmem>>, %arg14: memref<1x8x32xf32, #tpu.memory_space<vmem>>, %arg15: memref<32x8xbf16, #tpu.memory_space<vmem>>, %arg16: memref<8x32xbf16, #tpu.memory_space<vmem>>, %arg17: memref<8x32xf32, #tpu.memory_space<vmem>>) attributes {dimension_semantics = [#tpu.dimension_semantics<parallel>, #tpu.dimension_semantics<arbitrary>], iteration_bounds = array<i64: 2, 1>, scalar_prefetch = 0 : i64, scratch_operands = 3 : i64, tpu.core_type = #tpu.core_type<tc>, window_params = [{transform_indices = @transform_0, window_bounds = array<i64: 1, 8, 32>}, {transform_indices = @transform_1, window_bounds = array<i64: 1, 1, 8>}, {pipeline_mode = #tpu.pipeline_mode<synchronous>, transform_indices = @transform_2, window_bounds = array<i64: 32, 32>}, {pipeline_mode = #tpu.pipeline_mode<synchronous>, transform_indices = @transform_3, window_bounds = array<i64: 1, 32>}, {pipeline_mode = #tpu.pipeline_mode<synchronous>, transform_indices = @transform_4, window_bounds = array<i64: 32, 32>}, {pipeline_mode = #tpu.pipeline_mode<synchronous>, transform_indices = @transform_5, window_bounds = array<i64: 1, 32>}, {pipeline_mode = #tpu.pipeline_mode<synchronous>, transform_indices = @transform_6, window_bounds = array<i64: 32, 32>}, {pipeline_mode = #tpu.pipeline_mode<synchronous>, transform_indices = @transform_7, window_bounds = array<i64: 1, 32>}, {pipeline_mode = #tpu.pipeline_mode<synchronous>, transform_indices = @transform_8, window_bounds = array<i64: 32, 32>}, {pipeline_mode = #tpu.pipeline_mode<synchronous>, transform_indices = @transform_9, window_bounds = array<i64: 1, 32>}, {pipeline_mode = #tpu.pipeline_mode<synchronous>, transform_indices = @transform_10, window_bounds = array<i64: 1, 32>}, {pipeline_mode = #tpu.pipeline_mode<synchronous>, transform_indices = @transform_11, window_bounds = array<i64: 1, 32>}, {transform_indices = @transform_12, window_bounds = array<i64: 1, 8, 32>}]} {
    %c0_i32 = arith.constant 0 : i32
    %0 = arith.cmpi eq, %arg1, %c0_i32 : i32
    %1 = arith.extui %0 : i1 to i32
    %c0_i32_0 = arith.constant 0 : i32
    %2 = arith.cmpi ne, %1, %c0_i32_0 : i32
    scf.if %2 {
      %c0_65 = arith.constant 0 : index
      %c0_66 = arith.constant 0 : index
      %c0_67 = arith.constant 0 : index
      %126 = vector.load %arg2[%c0_65, %c0_66, %c0_67] : memref<1x8x32xf32, #tpu.memory_space<vmem>>, vector<1x8x32xf32>
      %127 = vector.shape_cast %126 : vector<1x8x32xf32> to vector<8x32xf32>
      %128 = arith.truncf %127 : vector<8x32xf32> to vector<8x32xbf16>
      %c0_68 = arith.constant 0 : index
      %c0_69 = arith.constant 0 : index
      %129 = vector.load %arg6[%c0_68, %c0_69] : memref<32x32xbf16, #tpu.memory_space<vmem>>, vector<32x32xbf16>
      %cst_70 = arith.constant dense<0.000000e+00> : vector<8x32xf32>
      %130 = tpu.matmul %128, %129, %cst_70 {dimension_numbers = #tpu.dot_dimension_numbers<[1], [0], [0], [1], [0, 0, 1, 1], [], []>} : vector<8x32xbf16>, vector<32x32xbf16>, vector<8x32xf32> -> vector<8x32xf32>
      %c0_71 = arith.constant 0 : index
      %c0_72 = arith.constant 0 : index
      %131 = vector.load %arg7[%c0_71, %c0_72] : memref<1x32xf32, #tpu.memory_space<vmem>>, vector<1x32xf32>
      %132 = vector.broadcast %131 : vector<1x32xf32> to vector<8x32xf32>
      %133 = arith.addf %130, %132 : vector<8x32xf32>
      %c0_73 = arith.constant 0 : index
      %c0_74 = arith.constant 0 : index
      %134 = vector.load %arg8[%c0_73, %c0_74] : memref<32x32xbf16, #tpu.memory_space<vmem>>, vector<32x32xbf16>
      %cst_75 = arith.constant dense<0.000000e+00> : vector<8x32xf32>
      %135 = tpu.matmul %128, %134, %cst_75 {dimension_numbers = #tpu.dot_dimension_numbers<[1], [0], [0], [1], [0, 0, 1, 1], [], []>} : vector<8x32xbf16>, vector<32x32xbf16>, vector<8x32xf32> -> vector<8x32xf32>
      %c0_76 = arith.constant 0 : index
      %c0_77 = arith.constant 0 : index
      %136 = vector.load %arg9[%c0_76, %c0_77] : memref<1x32xf32, #tpu.memory_space<vmem>>, vector<1x32xf32>
      %137 = vector.broadcast %136 : vector<1x32xf32> to vector<8x32xf32>
      %138 = arith.addf %135, %137 : vector<8x32xf32>
      %139 = arith.truncf %133 : vector<8x32xf32> to vector<8x32xbf16>
      %140 = tpu.transpose %139, [1, 0] : vector<8x32xbf16> -> vector<32x8xbf16>
      %c0_78 = arith.constant 0 : index
      %c0_79 = arith.constant 0 : index
      %141 = vector.load %arg15[%c0_78, %c0_79] : memref<32x8xbf16, #tpu.memory_space<vmem>>, vector<32x8xbf16>
      tpu.vector_store %arg15[%c0_78, %c0_79], %140 {strides = array<i32>} : memref<32x8xbf16, #tpu.memory_space<vmem>>, vector<32x8xbf16>,
      %142 = arith.truncf %138 : vector<8x32xf32> to vector<8x32xbf16>
      %c0_80 = arith.constant 0 : index
      %c0_81 = arith.constant 0 : index
      %143 = vector.load %arg16[%c0_80, %c0_81] : memref<8x32xbf16, #tpu.memory_space<vmem>>, vector<8x32xbf16>
      tpu.vector_store %arg16[%c0_80, %c0_81], %142 {strides = array<i32>} : memref<8x32xbf16, #tpu.memory_space<vmem>>, vector<8x32xbf16>,
    } else {
    }
    %c8_i32 = arith.constant 8 : i32
    %3 = arith.muli %arg1, %c8_i32 : i32
    %4 = tpu.assume_multiple %3, 8 : i32
    %c0 = arith.constant 0 : index
    %5 = arith.index_cast %4 : i32 to index
    %c0_1 = arith.constant 0 : index
    %6 = vector.load %arg2[%c0, %5, %c0_1] : memref<1x8x32xf32, #tpu.memory_space<vmem>>, vector<1x8x32xf32>
    %7 = vector.shape_cast %6 : vector<1x8x32xf32> to vector<8x32xf32>
    %8 = arith.truncf %7 : vector<8x32xf32> to vector<8x32xbf16>
    %c0_2 = arith.constant 0 : index
    %c0_3 = arith.constant 0 : index
    %9 = vector.load %arg4[%c0_2, %c0_3] : memref<32x32xbf16, #tpu.memory_space<vmem>>, vector<32x32xbf16>
    %cst = arith.constant dense<0.000000e+00> : vector<8x32xf32>
    %10 = tpu.matmul %8, %9, %cst {dimension_numbers = #tpu.dot_dimension_numbers<[1], [0], [0], [1], [0, 0, 1, 1], [], []>} : vector<8x32xbf16>, vector<32x32xbf16>, vector<8x32xf32> -> vector<8x32xf32>
    %c0_4 = arith.constant 0 : index
    %c0_5 = arith.constant 0 : index
    %11 = vector.load %arg5[%c0_4, %c0_5] : memref<1x32xf32, #tpu.memory_space<vmem>>, vector<1x32xf32>
    %12 = vector.broadcast %11 : vector<1x32xf32> to vector<8x32xf32>
    %13 = arith.addf %10, %12 : vector<8x32xf32>
    %14 = arith.truncf %13 : vector<8x32xf32> to vector<8x32xbf16>
    %c0_6 = arith.constant 0 : index
    %c0_7 = arith.constant 0 : index
    %c0_8 = arith.constant 0 : index
    %15 = vector.load %arg3[%c0_6, %c0_7, %c0_8] : memref<1x1x8xf32, #tpu.memory_space<vmem>>, vector<1x1x8xf32>
    %16 = vector.shape_cast %15 : vector<1x1x8xf32> to vector<1x8xf32>
    %17 = vector.extract_strided_slice %14 {offsets = [0, 0], sizes = [8, 8], strides = [1, 1]} : vector<8x32xbf16> to vector<8x8xbf16>
    %c0_9 = arith.constant 0 : index
    %c0_10 = arith.constant 0 : index
    %18 = vector.load %arg15[%c0_9, %c0_10] : memref<32x8xbf16, #tpu.memory_space<vmem>>, vector<8x8xbf16>
    %c0_11 = arith.constant 0 : index
    %c0_12 = arith.constant 0 : index
    %19 = vector.load %arg16[%c0_11, %c0_12] : memref<8x32xbf16, #tpu.memory_space<vmem>>, vector<8x8xbf16>
    %cst_13 = arith.constant dense<0.000000e+00> : vector<8x8xf32>
    %20 = tpu.matmul %17, %18, %cst_13 {dimension_numbers = #tpu.dot_dimension_numbers<[1], [0], [0], [1], [0, 0, 1, 1], [], []>} : vector<8x8xbf16>, vector<8x8xbf16>, vector<8x8xf32> -> vector<8x8xf32>
    %21 = vector.broadcast %16 : vector<1x8xf32> to vector<8x8xf32>
    %22 = arith.addf %20, %21 : vector<8x8xf32>
    %cst_14 = arith.constant dense<0xFF800000> : vector<8xf32>
    %23 = vector.multi_reduction <maximumf>, %22, %cst_14 [1] : vector<8x8xf32> to vector<8xf32>
    %24 = vector.shape_cast %23 : vector<8xf32> to vector<8x1xf32>
    %25 = vector.broadcast %24 : vector<8x1xf32> to vector<8x8xf32>
    %26 = arith.subf %22, %25 : vector<8x8xf32>
    %27 = math.exp %26 : vector<8x8xf32>
    %cst_15 = arith.constant dense<0.000000e+00> : vector<8xf32>
    %28 = vector.multi_reduction <add>, %27, %cst_15 [1] : vector<8x8xf32> to vector<8xf32>
    %29 = vector.shape_cast %28 : vector<8xf32> to vector<8x1xf32>
    %30 = tpu.reciprocal %29 {approx = true} : vector<8x1xf32> -> vector<8x1xf32>
    %31 = vector.broadcast %30 : vector<8x1xf32> to vector<8x8xf32>
    %32 = arith.mulf %27, %31 : vector<8x8xf32>
    %33 = arith.truncf %32 : vector<8x8xf32> to vector<8x8xbf16>
    %cst_16 = arith.constant dense<0.000000e+00> : vector<8x8xf32>
    %34 = tpu.matmul %33, %19, %cst_16 {dimension_numbers = #tpu.dot_dimension_numbers<[1], [0], [0], [1], [0, 0, 1, 1], [], []>} : vector<8x8xbf16>, vector<8x8xbf16>, vector<8x8xf32> -> vector<8x8xf32>
    %c0_17 = arith.constant 0 : index
    %c0_18 = arith.constant 0 : index
    %35 = vector.load %arg17[%c0_17, %c0_18] : memref<8x32xf32, #tpu.memory_space<vmem>>, vector<8x8xf32>
    tpu.vector_store %arg17[%c0_17, %c0_18], %34 {strides = array<i32>} : memref<8x32xf32, #tpu.memory_space<vmem>>, vector<8x8xf32>,
    %36 = vector.extract_strided_slice %14 {offsets = [0, 8], sizes = [8, 8], strides = [1, 1]} : vector<8x32xbf16> to vector<8x8xbf16>
    %c8 = arith.constant 8 : index
    %c0_19 = arith.constant 0 : index
    %37 = vector.load %arg15[%c8, %c0_19] : memref<32x8xbf16, #tpu.memory_space<vmem>>, vector<8x8xbf16>
    %c0_20 = arith.constant 0 : index
    %c8_21 = arith.constant 8 : index
    %38 = vector.load %arg16[%c0_20, %c8_21] : memref<8x32xbf16, #tpu.memory_space<vmem>>, vector<8x8xbf16>
    %cst_22 = arith.constant dense<0.000000e+00> : vector<8x8xf32>
    %39 = tpu.matmul %36, %37, %cst_22 {dimension_numbers = #tpu.dot_dimension_numbers<[1], [0], [0], [1], [0, 0, 1, 1], [], []>} : vector<8x8xbf16>, vector<8x8xbf16>, vector<8x8xf32> -> vector<8x8xf32>
    %40 = vector.broadcast %16 : vector<1x8xf32> to vector<8x8xf32>
    %41 = arith.addf %39, %40 : vector<8x8xf32>
    %cst_23 = arith.constant dense<0xFF800000> : vector<8xf32>
    %42 = vector.multi_reduction <maximumf>, %41, %cst_23 [1] : vector<8x8xf32> to vector<8xf32>
    %43 = vector.shape_cast %42 : vector<8xf32> to vector<8x1xf32>
    %44 = vector.broadcast %43 : vector<8x1xf32> to vector<8x8xf32>
    %45 = arith.subf %41, %44 : vector<8x8xf32>
    %46 = math.exp %45 : vector<8x8xf32>
    %cst_24 = arith.constant dense<0.000000e+00> : vector<8xf32>
    %47 = vector.multi_reduction <add>, %46, %cst_24 [1] : vector<8x8xf32> to vector<8xf32>
    %48 = vector.shape_cast %47 : vector<8xf32> to vector<8x1xf32>
    %49 = tpu.reciprocal %48 {approx = true} : vector<8x1xf32> -> vector<8x1xf32>
    %50 = vector.broadcast %49 : vector<8x1xf32> to vector<8x8xf32>
    %51 = arith.mulf %46, %50 : vector<8x8xf32>
    %52 = arith.truncf %51 : vector<8x8xf32> to vector<8x8xbf16>
    %cst_25 = arith.constant dense<0.000000e+00> : vector<8x8xf32>
    %53 = tpu.matmul %52, %38, %cst_25 {dimension_numbers = #tpu.dot_dimension_numbers<[1], [0], [0], [1], [0, 0, 1, 1], [], []>} : vector<8x8xbf16>, vector<8x8xbf16>, vector<8x8xf32> -> vector<8x8xf32>
    %c0_26 = arith.constant 0 : index
    %c8_27 = arith.constant 8 : index
    %54 = vector.load %arg17[%c0_26, %c8_27] : memref<8x32xf32, #tpu.memory_space<vmem>>, vector<8x8xf32>
    tpu.vector_store %arg17[%c0_26, %c8_27], %53 {strides = array<i32>} : memref<8x32xf32, #tpu.memory_space<vmem>>, vector<8x8xf32>,
    %55 = vector.extract_strided_slice %14 {offsets = [0, 16], sizes = [8, 8], strides = [1, 1]} : vector<8x32xbf16> to vector<8x8xbf16>
    %c16 = arith.constant 16 : index
    %c0_28 = arith.constant 0 : index
    %56 = vector.load %arg15[%c16, %c0_28] : memref<32x8xbf16, #tpu.memory_space<vmem>>, vector<8x8xbf16>
    %c0_29 = arith.constant 0 : index
    %c16_30 = arith.constant 16 : index
    %57 = vector.load %arg16[%c0_29, %c16_30] : memref<8x32xbf16, #tpu.memory_space<vmem>>, vector<8x8xbf16>
    %cst_31 = arith.constant dense<0.000000e+00> : vector<8x8xf32>
    %58 = tpu.matmul %55, %56, %cst_31 {dimension_numbers = #tpu.dot_dimension_numbers<[1], [0], [0], [1], [0, 0, 1, 1], [], []>} : vector<8x8xbf16>, vector<8x8xbf16>, vector<8x8xf32> -> vector<8x8xf32>
    %59 = vector.broadcast %16 : vector<1x8xf32> to vector<8x8xf32>
    %60 = arith.addf %58, %59 : vector<8x8xf32>
    %cst_32 = arith.constant dense<0xFF800000> : vector<8xf32>
    %61 = vector.multi_reduction <maximumf>, %60, %cst_32 [1] : vector<8x8xf32> to vector<8xf32>
    %62 = vector.shape_cast %61 : vector<8xf32> to vector<8x1xf32>
    %63 = vector.broadcast %62 : vector<8x1xf32> to vector<8x8xf32>
    %64 = arith.subf %60, %63 : vector<8x8xf32>
    %65 = math.exp %64 : vector<8x8xf32>
    %cst_33 = arith.constant dense<0.000000e+00> : vector<8xf32>
    %66 = vector.multi_reduction <add>, %65, %cst_33 [1] : vector<8x8xf32> to vector<8xf32>
    %67 = vector.shape_cast %66 : vector<8xf32> to vector<8x1xf32>
    %68 = tpu.reciprocal %67 {approx = true} : vector<8x1xf32> -> vector<8x1xf32>
    %69 = vector.broadcast %68 : vector<8x1xf32> to vector<8x8xf32>
    %70 = arith.mulf %65, %69 : vector<8x8xf32>
    %71 = arith.truncf %70 : vector<8x8xf32> to vector<8x8xbf16>
    %cst_34 = arith.constant dense<0.000000e+00> : vector<8x8xf32>
    %72 = tpu.matmul %71, %57, %cst_34 {dimension_numbers = #tpu.dot_dimension_numbers<[1], [0], [0], [1], [0, 0, 1, 1], [], []>} : vector<8x8xbf16>, vector<8x8xbf16>, vector<8x8xf32> -> vector<8x8xf32>
    %c0_35 = arith.constant 0 : index
    %c16_36 = arith.constant 16 : index
    %73 = vector.load %arg17[%c0_35, %c16_36] : memref<8x32xf32, #tpu.memory_space<vmem>>, vector<8x8xf32>
    tpu.vector_store %arg17[%c0_35, %c16_36], %72 {strides = array<i32>} : memref<8x32xf32, #tpu.memory_space<vmem>>, vector<8x8xf32>,
    %74 = vector.extract_strided_slice %14 {offsets = [0, 24], sizes = [8, 8], strides = [1, 1]} : vector<8x32xbf16> to vector<8x8xbf16>
    %c24 = arith.constant 24 : index
    %c0_37 = arith.constant 0 : index
    %75 = vector.load %arg15[%c24, %c0_37] : memref<32x8xbf16, #tpu.memory_space<vmem>>, vector<8x8xbf16>
    %c0_38 = arith.constant 0 : index
    %c24_39 = arith.constant 24 : index
    %76 = vector.load %arg16[%c0_38, %c24_39] : memref<8x32xbf16, #tpu.memory_space<vmem>>, vector<8x8xbf16>
    %cst_40 = arith.constant dense<0.000000e+00> : vector<8x8xf32>
    %77 = tpu.matmul %74, %75, %cst_40 {dimension_numbers = #tpu.dot_dimension_numbers<[1], [0], [0], [1], [0, 0, 1, 1], [], []>} : vector<8x8xbf16>, vector<8x8xbf16>, vector<8x8xf32> -> vector<8x8xf32>
    %78 = vector.broadcast %16 : vector<1x8xf32> to vector<8x8xf32>
    %79 = arith.addf %77, %78 : vector<8x8xf32>
    %cst_41 = arith.constant dense<0xFF800000> : vector<8xf32>
    %80 = vector.multi_reduction <maximumf>, %79, %cst_41 [1] : vector<8x8xf32> to vector<8xf32>
    %81 = vector.shape_cast %80 : vector<8xf32> to vector<8x1xf32>
    %82 = vector.broadcast %81 : vector<8x1xf32> to vector<8x8xf32>
    %83 = arith.subf %79, %82 : vector<8x8xf32>
    %84 = math.exp %83 : vector<8x8xf32>
    %cst_42 = arith.constant dense<0.000000e+00> : vector<8xf32>
    %85 = vector.multi_reduction <add>, %84, %cst_42 [1] : vector<8x8xf32> to vector<8xf32>
    %86 = vector.shape_cast %85 : vector<8xf32> to vector<8x1xf32>
    %87 = tpu.reciprocal %86 {approx = true} : vector<8x1xf32> -> vector<8x1xf32>
    %88 = vector.broadcast %87 : vector<8x1xf32> to vector<8x8xf32>
    %89 = arith.mulf %84, %88 : vector<8x8xf32>
    %90 = arith.truncf %89 : vector<8x8xf32> to vector<8x8xbf16>
    %cst_43 = arith.constant dense<0.000000e+00> : vector<8x8xf32>
    %91 = tpu.matmul %90, %76, %cst_43 {dimension_numbers = #tpu.dot_dimension_numbers<[1], [0], [0], [1], [0, 0, 1, 1], [], []>} : vector<8x8xbf16>, vector<8x8xbf16>, vector<8x8xf32> -> vector<8x8xf32>
    %c0_44 = arith.constant 0 : index
    %c24_45 = arith.constant 24 : index
    %92 = vector.load %arg17[%c0_44, %c24_45] : memref<8x32xf32, #tpu.memory_space<vmem>>, vector<8x8xf32>
    tpu.vector_store %arg17[%c0_44, %c24_45], %91 {strides = array<i32>} : memref<8x32xf32, #tpu.memory_space<vmem>>, vector<8x8xf32>,
    %c0_46 = arith.constant 0 : index
    %c0_47 = arith.constant 0 : index
    %93 = vector.load %arg17[%c0_46, %c0_47] : memref<8x32xf32, #tpu.memory_space<vmem>>, vector<8x32xf32>
    %94 = arith.truncf %93 : vector<8x32xf32> to vector<8x32xbf16>
    %c0_48 = arith.constant 0 : index
    %c0_49 = arith.constant 0 : index
    %95 = vector.load %arg10[%c0_48, %c0_49] : memref<32x32xbf16, #tpu.memory_space<vmem>>, vector<32x32xbf16>
    %cst_50 = arith.constant dense<0.000000e+00> : vector<8x32xf32>
    %96 = tpu.matmul %94, %95, %cst_50 {dimension_numbers = #tpu.dot_dimension_numbers<[1], [0], [0], [1], [0, 0, 1, 1], [], []>} : vector<8x32xbf16>, vector<32x32xbf16>, vector<8x32xf32> -> vector<8x32xf32>
    %c0_51 = arith.constant 0 : index
    %c0_52 = arith.constant 0 : index
    %97 = vector.load %arg11[%c0_51, %c0_52] : memref<1x32xf32, #tpu.memory_space<vmem>>, vector<1x32xf32>
    %98 = vector.broadcast %97 : vector<1x32xf32> to vector<8x32xf32>
    %99 = arith.addf %96, %98 : vector<8x32xf32>
    %100 = arith.addf %99, %7 : vector<8x32xf32>
    %cst_53 = arith.constant dense<0.000000e+00> : vector<8xf32>
    %101 = vector.multi_reduction <add>, %100, %cst_53 [1] : vector<8x32xf32> to vector<8xf32>
    %102 = vector.shape_cast %101 : vector<8xf32> to vector<8x1xf32>
    %cst_54 = arith.constant 3.200000e+01 : f32
    %103 = vector.broadcast %cst_54 : f32 to vector<8x1xf32>
    %104 = arith.divf %102, %103 : vector<8x1xf32>
    %105 = vector.broadcast %104 : vector<8x1xf32> to vector<8x32xf32>
    %106 = arith.subf %100, %105 : vector<8x32xf32>
    %107 = arith.mulf %106, %106 : vector<8x32xf32>
    %cst_55 = arith.constant dense<0.000000e+00> : vector<8xf32>
    %108 = vector.multi_reduction <add>, %107, %cst_55 [1] : vector<8x32xf32> to vector<8xf32>
    %109 = vector.shape_cast %108 : vector<8xf32> to vector<8x1xf32>
    %cst_56 = arith.constant 3.200000e+01 : f32
    %110 = vector.broadcast %cst_56 : f32 to vector<8x1xf32>
    %111 = arith.divf %109, %110 : vector<8x1xf32>
    %cst_57 = arith.constant 9.99999996E-13 : f32
    %112 = vector.broadcast %cst_57 : f32 to vector<8x1xf32>
    %113 = arith.addf %111, %112 : vector<8x1xf32>
    %114 = math.rsqrt %113 : vector<8x1xf32>
    %c0_58 = arith.constant 0 : index
    %c0_59 = arith.constant 0 : index
    %115 = vector.load %arg12[%c0_58, %c0_59] : memref<1x32xf32, #tpu.memory_space<vmem>>, vector<1x32xf32>
    %116 = vector.broadcast %114 : vector<8x1xf32> to vector<8x32xf32>
    %117 = vector.broadcast %115 : vector<1x32xf32> to vector<8x32xf32>
    %118 = arith.mulf %116, %117 : vector<8x32xf32>
    %119 = arith.mulf %106, %118 : vector<8x32xf32>
    %c0_60 = arith.constant 0 : index
    %c0_61 = arith.constant 0 : index
    %120 = vector.load %arg13[%c0_60, %c0_61] : memref<1x32xf32, #tpu.memory_space<vmem>>, vector<1x32xf32>
    %121 = vector.broadcast %120 : vector<1x32xf32> to vector<8x32xf32>
    %122 = arith.addf %119, %121 : vector<8x32xf32>
    %c0_62 = arith.constant 0 : index
    %c0_63 = arith.constant 0 : index
    %c0_64 = arith.constant 0 : index
    %123 = vector.load %arg14[%c0_62, %c0_63, %c0_64] : memref<1x8x32xf32, #tpu.memory_space<vmem>>, vector<1x8x32xf32>
    %124 = vector.shape_cast %123 : vector<1x8x32xf32> to vector<8x32xf32>
    %125 = vector.shape_cast %122 : vector<8x32xf32> to vector<1x8x32xf32>
    tpu.vector_store %arg14[%c0_62, %c0_63, %c0_64], %125 {strides = array<i32>} : memref<1x8x32xf32, #tpu.memory_space<vmem>>, vector<1x8x32xf32>,
    return
  }
  func.func @transform_0(%arg0: i32, %arg1: i32) -> (i32, i32, i32) {
    %c0_i32 = arith.constant 0 : i32
    %c0_i32_0 = arith.constant 0 : i32
    %c0_i32_1 = arith.constant 0 : i32
    return %arg0, %c0_i32, %c0_i32_0 : i32, i32, i32
  }
  func.func @transform_1(%arg0: i32, %arg1: i32) -> (i32, i32, i32) {
    %c0_i32 = arith.constant 0 : i32
    %c0_i32_0 = arith.constant 0 : i32
    %c0_i32_1 = arith.constant 0 : i32
    return %arg0, %c0_i32, %c0_i32_0 : i32, i32, i32
  }
  func.func @transform_2(%arg0: i32, %arg1: i32) -> (i32, i32) {
    %c0_i32 = arith.constant 0 : i32
    %c0_i32_0 = arith.constant 0 : i32
    %c0_i32_1 = arith.constant 0 : i32
    return %c0_i32, %c0_i32_0 : i32, i32
  }
  func.func @transform_3(%arg0: i32, %arg1: i32) -> (i32, i32) {
    %c0_i32 = arith.constant 0 : i32
    %c0_i32_0 = arith.constant 0 : i32
    %c0_i32_1 = arith.constant 0 : i32
    return %c0_i32, %c0_i32_0 : i32, i32
  }
  func.func @transform_4(%arg0: i32, %arg1: i32) -> (i32, i32) {
    %c0_i32 = arith.constant 0 : i32
    %c0_i32_0 = arith.constant 0 : i32
    %c0_i32_1 = arith.constant 0 : i32
    return %c0_i32, %c0_i32_0 : i32, i32
  }
  func.func @transform_5(%arg0: i32, %arg1: i32) -> (i32, i32) {
    %c0_i32 = arith.constant 0 : i32
    %c0_i32_0 = arith.constant 0 : i32
    %c0_i32_1 = arith.constant 0 : i32
    return %c0_i32, %c0_i32_0 : i32, i32
  }
  func.func @transform_6(%arg0: i32, %arg1: i32) -> (i32, i32) {
    %c0_i32 = arith.constant 0 : i32
    %c0_i32_0 = arith.constant 0 : i32
    %c0_i32_1 = arith.constant 0 : i32
    return %c0_i32, %c0_i32_0 : i32, i32
  }
  func.func @transform_7(%arg0: i32, %arg1: i32) -> (i32, i32) {
    %c0_i32 = arith.constant 0 : i32
    %c0_i32_0 = arith.constant 0 : i32
    %c0_i32_1 = arith.constant 0 : i32
    return %c0_i32, %c0_i32_0 : i32, i32
  }
  func.func @transform_8(%arg0: i32, %arg1: i32) -> (i32, i32) {
    %c0_i32 = arith.constant 0 : i32
    %c0_i32_0 = arith.constant 0 : i32
    %c0_i32_1 = arith.constant 0 : i32
    return %c0_i32, %c0_i32_0 : i32, i32
  }
  func.func @transform_9(%arg0: i32, %arg1: i32) -> (i32, i32) {
    %c0_i32 = arith.constant 0 : i32
    %c0_i32_0 = arith.constant 0 : i32
    %c0_i32_1 = arith.constant 0 : i32
    return %c0_i32, %c0_i32_0 : i32, i32
  }
  func.func @transform_10(%arg0: i32, %arg1: i32) -> (i32, i32) {
    %c0_i32 = arith.constant 0 : i32
    %c0_i32_0 = arith.constant 0 : i32
    %c0_i32_1 = arith.constant 0 : i32
    return %c0_i32, %c0_i32_0 : i32, i32
  }
  func.func @transform_11(%arg0: i32, %arg1: i32) -> (i32, i32) {
    %c0_i32 = arith.constant 0 : i32
    %c0_i32_0 = arith.constant 0 : i32
    %c0_i32_1 = arith.constant 0 : i32
    return %c0_i32, %c0_i32_0 : i32, i32
  }
  func.func @transform_12(%arg0: i32, %arg1: i32) -> (i32, i32, i32) {
    %c0_i32 = arith.constant 0 : i32
    %c0_i32_0 = arith.constant 0 : i32
    return %arg0, %arg1, %c0_i32 : i32, i32, i32
  }
}

</mosaic_0001>

<llo_original>
// kernel: tpu_custom_call.1
$region0: #{tpu_custom_call.1}
  #allocation0 [shape = 'u32[]', space=smem, size = 0x4, offset = 0x4, fixed_abs, tag = 'smem constant byte address 0x4 - core index']
  #allocation1 [shape = 'u32[72,128]{1,0:T(1,128)}', space=vmem, size = 0x9000, scoped, tag = 'internal scratch']
  #allocation2 [shape = 'bf16[32,8]{1,0:T(8,128)(2,1)}', space=vmem, size = 0x2000, scoped, tag = 'scratch operand']
  #allocation3 [shape = 'bf16[8,32]{1,0:T(8,128)(2,1)}', space=vmem, size = 0x800, scoped, tag = 'scratch operand']
  #allocation4 [shape = 'f32[8,32]{1,0:T(8,128)}', space=vmem, size = 0x1000, scoped, tag = 'scratch operand']
  %s0 = inlined_call_operand.hbm [shape: f32[2,8,32], index: 0, kind: input, shape index: {}]
  %s1 = inlined_call_operand.hbm [shape: f32[2,1,8], index: 1, kind: input, shape index: {}]
  %s2 = inlined_call_operand.hbm [shape: bf16[32,32], index: 2, kind: input, shape index: {}]
  %s3 = inlined_call_operand.vmem [shape: f32[1,32], index: 3, kind: input, shape index: {}]
  %s4 = inlined_call_operand.hbm [shape: bf16[32,32], index: 4, kind: input, shape index: {}]
  %s5 = inlined_call_operand.vmem [shape: f32[1,32], index: 5, kind: input, shape index: {}]
  %s6 = inlined_call_operand.hbm [shape: bf16[32,32], index: 6, kind: input, shape index: {}]
  %s7 = inlined_call_operand.vmem [shape: f32[1,32], index: 7, kind: input, shape index: {}]
  %s8 = inlined_call_operand.hbm [shape: bf16[32,32], index: 8, kind: input, shape index: {}]
  %s9 = inlined_call_operand.vmem [shape: f32[1,32], index: 9, kind: input, shape index: {}]
  %s10 = inlined_call_operand.vmem [shape: f32[1,32], index: 10, kind: input, shape index: {}]
  %s11 = inlined_call_operand.vmem [shape: f32[1,32], index: 11, kind: input, shape index: {}]
  %s12 = inlined_call_operand.hbm [shape: f32[2,8,32], index: 12, kind: output, shape index: {}]
  %s13 = sld [smem:[#allocation0]]
  $region109: #{tpu_custom_call.1} parent=0
    _
  %s15 = ssub.s32 1, %s13
  %s16 = scalar_select 0, %s15, %s13
  $region1: #{tpu_custom_call.1} parent=0
    #allocation5 [shape = 'u8[8192]{0}', space=vmem, size = 0x2000, scoped, tag = 'input window, operand 0']
    #allocation6 [shape = 's32[2]{0}', space=sflag, size = 0x8, scoped, tag = 'scoped memory for tpu_custom_call.1']
    #allocation7 [shape = 's32[2]{0}', space=sflag, size = 0x8, scoped, tag = 'scoped memory for tpu_custom_call.1']
    #allocation8 [shape = 'u8[1024]{0}', space=vmem, size = 0x400, scoped, tag = 'input window, operand 1']
    #allocation9 [shape = 's32[2]{0}', space=sflag, size = 0x8, scoped, tag = 'scoped memory for tpu_custom_call.1']
    #allocation10 [shape = 'u8[8192]{0}', space=vmem, size = 0x2000, scoped, tag = 'input window, operand 2, single buffered']
    #allocation11 [shape = 'u8[8192]{0}', space=vmem, size = 0x2000, scoped, tag = 'input window, operand 4, single buffered']
    #allocation12 [shape = 's32[1]{0}', space=sflag, size = 0x4, scoped, tag = 'scoped memory for tpu_custom_call.1']
    #allocation13 [shape = 'u8[8192]{0}', space=vmem, size = 0x2000, scoped, tag = 'input window, operand 6, single buffered']
    #allocation14 [shape = 'u8[8192]{0}', space=vmem, size = 0x2000, scoped, tag = 'input window, operand 8, single buffered']
    #allocation15 [shape = 's32[1]{0}', space=sflag, size = 0x4, scoped, tag = 'scoped memory for tpu_custom_call.1']
    #allocation16 [shape = 'u8[8192]{0}', space=vmem, size = 0x2000, scoped, tag = 'output window, operand 0']
    %17 = vsyncpa [#allocation6], 0
    %s18 = scalar_lea.sflag [#allocation6], 1
    %19 = vsyncpa %s18, 0
    %20 = vsyncpa [#allocation9], 0
    %s21 = scalar_lea.sflag [#allocation9], 1
    %22 = vsyncpa %s21, 0
    %23 = vsyncpa [#allocation12], 0
    %24 = vsyncpa [#allocation15], 0
    %25 = vsyncpa [#allocation7], 0
    %s26 = scalar_lea.sflag [#allocation7], 1
    %27 = vsyncpa %s26, 0
    loop: start=0, step=1, limit=4
    $region2: #{tpu_custom_call.1} parent=1 // loop_pre_header
      _
    $region3: #{tpu_custom_call.1} parent=1 // loop_header
      %s29 = sphi 0, %s33
      %p30 = scmp.ge.s32.totalorder %s29, 4
      %s36 = sphi 0, %s48
      %s37 = sphi 0, %s44
      %s38 = sphi 0, %s36
      %s39 = sphi 0, %s37
      %s40 = sphi 0, %s38
      %s41 = sphi 0, %s39
      %s51 = sphi 0, %s53
      %s54 = sphi 0, %s51
      %s55 = sphi 0, %s54
      %s71 = sphi 0, %s55
      %s77 = sphi 0, %s79
      %s80 = sphi 0, %s77
      %s81 = sphi 0, %s80
      %s97 = sphi 0, %s81
      %s101 = sphi 0, %s101
      %s103 = sphi 0, %s101
      %s104 = sphi 0, %s103
      %s118 = sphi 0, %s104
      %s122 = sphi 0, %s122
      %s124 = sphi 0, %s122
      %s125 = sphi 0, %s124
      %s139 = sphi 0, %s125
      %s143 = sphi 0, %s143
      %s145 = sphi 0, %s143
      %s146 = sphi 0, %s145
      %s160 = sphi 0, %s146
      %s164 = sphi 0, %s164
      %s166 = sphi 0, %s164
      %s167 = sphi 0, %s166
      %s181 = sphi 0, %s167
      %s185 = sphi 0, %s185
      %s187 = sphi 0, %s185
      %s188 = sphi 0, %s187
      %s202 = sphi 0, %s188
      %s206 = sphi 0, %s206
      %s208 = sphi 0, %s206
      %s209 = sphi 0, %s208
      %s223 = sphi 0, %s209
      %s227 = sphi 0, %s227
      %s229 = sphi 0, %s227
      %s230 = sphi 0, %s229
      %s244 = sphi 0, %s230
      %s248 = sphi 0, %s248
      %s250 = sphi 0, %s248
      %s251 = sphi 0, %s250
      %s265 = sphi 0, %s251
      %s269 = sphi 0, %s269
      %s271 = sphi 0, %s269
      %s272 = sphi 0, %s271
      %s286 = sphi 0, %s272
      %s290 = sphi 0, %s290
      %s292 = sphi 0, %s290
      %s293 = sphi 0, %s292
      %s307 = sphi 0, %s293
      %s315 = sphi 0, %s317
      %s318 = sphi 0, %s315
      %s319 = sphi 0, %s318
      %s335 = sphi 0, %s319
    $region4: #{tpu_custom_call.1} parent=1 // loop_header_branch
      %32 = sbr.rel (%p30) target = $region8
    $region5: #{tpu_custom_call.1} parent=1 // loop_body
      %s34 = ssub.s32 %s29, 1
      %s35 = ssub.s32 %s29, 2
      %s42 = sadd.s32 1, %s37
      %p43 = scmp.ge.s32.totalorder %s42, 1
      %s44 = scalar_select %p43, 0, %s42
      %s45 = sadd.s32 1, %s36
      %s46 = scalar_select %p43, %s45, %s36
      %p47 = scmp.ge.s32.totalorder %s46, 2
      %s48 = scalar_select %p47, 0, %s46
      %s49 = ssub.s32 %s36, %s48
      %p50 = scmp.eq.s32.totalorder %s49, 0
      %s52 = sadd.s32 %s51, 1
      %s53 = scalar_select %p50, %s51, %s52
      %p56 = pneg %p50
      %p57 = scmp.eq.s32.totalorder %s29, 1
      %p58 = por %p56, %p57
      %p59 = scmp.ne.s32.totalorder %s51, %s54
      %p60 = scmp.eq.s32.totalorder %s29, 0
      %p61 = por %p59, %p60
      %p62 = scmp.ne.s32.totalorder %s51, %s54
      %p63 = scmp.eq.s32.totalorder %s34, 1
      %p64 = por %p62, %p63
      %p65 = scmp.ne.s32.totalorder %s54, %s55
      %p66 = scmp.eq.s32.totalorder %s34, 0
      %p67 = por %p65, %p66
      %p68 = scmp.ne.s32.totalorder %s54, %s55
      %p69 = scmp.eq.s32.totalorder %s35, 1
      %p70 = por %p68, %p69
      %p72 = scmp.ne.s32.totalorder %s55, %s71
      %p73 = scmp.eq.s32.totalorder %s35, 0
      %p74 = por %p72, %p73
      %s75 = ssub.s32 %s36, %s48
      %p76 = scmp.eq.s32.totalorder %s75, 0
      %s78 = sadd.s32 %s77, 1
      %s79 = scalar_select %p76, %s77, %s78
      %p82 = pneg %p76
      %p83 = scmp.eq.s32.totalorder %s29, 1
      %p84 = por %p82, %p83
      %p85 = scmp.ne.s32.totalorder %s77, %s80
      %p86 = scmp.eq.s32.totalorder %s29, 0
      %p87 = por %p85, %p86
      %p88 = scmp.ne.s32.totalorder %s77, %s80
      %p89 = scmp.eq.s32.totalorder %s34, 1
      %p90 = por %p88, %p89
      %p91 = scmp.ne.s32.totalorder %s80, %s81
      %p92 = scmp.eq.s32.totalorder %s34, 0
      %p93 = por %p91, %p92
      %p94 = scmp.ne.s32.totalorder %s80, %s81
      %p95 = scmp.eq.s32.totalorder %s35, 1
      %p96 = por %p94, %p95
      %p98 = scmp.ne.s32.totalorder %s81, %s97
      %p99 = scmp.eq.s32.totalorder %s35, 0
      %p100 = por %p98, %p99
      %s102 = sadd.s32 %s101, 1
      %p105 = scmp.eq.s32.totalorder %s29, 1
      %p106 = scmp.ne.s32.totalorder %s101, %s103
      %p107 = scmp.eq.s32.totalorder %s29, 0
      %p108 = por %p106, %p107
      %p109 = scmp.ne.s32.totalorder %s101, %s103
      %p110 = scmp.eq.s32.totalorder %s34, 1
      %p111 = por %p109, %p110
      %p112 = scmp.ne.s32.totalorder %s103, %s104
      %p113 = scmp.eq.s32.totalorder %s34, 0
      %p114 = por %p112, %p113
      %p115 = scmp.ne.s32.totalorder %s103, %s104
      %p116 = scmp.eq.s32.totalorder %s35, 1
      %p117 = por %p115, %p116
      %p119 = scmp.ne.s32.totalorder %s104, %s118
      %p120 = scmp.eq.s32.totalorder %s35, 0
      %p121 = por %p119, %p120
      %s123 = sadd.s32 %s122, 1
      %p126 = scmp.eq.s32.totalorder %s29, 1
      %p127 = scmp.ne.s32.totalorder %s122, %s124
      %p128 = scmp.eq.s32.totalorder %s29, 0
      %p129 = por %p127, %p128
      %p130 = scmp.ne.s32.totalorder %s122, %s124
      %p131 = scmp.eq.s32.totalorder %s34, 1
      %p132 = por %p130, %p131
      %p133 = scmp.ne.s32.totalorder %s124, %s125
      %p134 = scmp.eq.s32.totalorder %s34, 0
      %p135 = por %p133, %p134
      %p136 = scmp.ne.s32.totalorder %s124, %s125
      %p137 = scmp.eq.s32.totalorder %s35, 1
      %p138 = por %p136, %p137
      %p140 = scmp.ne.s32.totalorder %s125, %s139
      %p141 = scmp.eq.s32.totalorder %s35, 0
      %p142 = por %p140, %p141
      %s144 = sadd.s32 %s143, 1
      %p147 = scmp.eq.s32.totalorder %s29, 1
      %p148 = scmp.ne.s32.totalorder %s143, %s145
      %p149 = scmp.eq.s32.totalorder %s29, 0
      %p150 = por %p148, %p149
      %p151 = scmp.ne.s32.totalorder %s143, %s145
      %p152 = scmp.eq.s32.totalorder %s34, 1
      %p153 = por %p151, %p152
      %p154 = scmp.ne.s32.totalorder %s145, %s146
      %p155 = scmp.eq.s32.totalorder %s34, 0
      %p156 = por %p154, %p155
      %p157 = scmp.ne.s32.totalorder %s145, %s146
      %p158 = scmp.eq.s32.totalorder %s35, 1
      %p159 = por %p157, %p158
      %p161 = scmp.ne.s32.totalorder %s146, %s160
      %p162 = scmp.eq.s32.totalorder %s35, 0
      %p163 = por %p161, %p162
      %s165 = sadd.s32 %s164, 1
      %p168 = scmp.eq.s32.totalorder %s29, 1
      %p169 = scmp.ne.s32.totalorder %s164, %s166
      %p170 = scmp.eq.s32.totalorder %s29, 0
      %p171 = por %p169, %p170
      %p172 = scmp.ne.s32.totalorder %s164, %s166
      %p173 = scmp.eq.s32.totalorder %s34, 1
      %p174 = por %p172, %p173
      %p175 = scmp.ne.s32.totalorder %s166, %s167
      %p176 = scmp.eq.s32.totalorder %s34, 0
      %p177 = por %p175, %p176
      %p178 = scmp.ne.s32.totalorder %s166, %s167
      %p179 = scmp.eq.s32.totalorder %s35, 1
      %p180 = por %p178, %p179
      %p182 = scmp.ne.s32.totalorder %s167, %s181
      %p183 = scmp.eq.s32.totalorder %s35, 0
      %p184 = por %p182, %p183
      %s186 = sadd.s32 %s185, 1
      %p189 = scmp.eq.s32.totalorder %s29, 1
      %p190 = scmp.ne.s32.totalorder %s185, %s187
      %p191 = scmp.eq.s32.totalorder %s29, 0
      %p192 = por %p190, %p191
      %p193 = scmp.ne.s32.totalorder %s185, %s187
      %p194 = scmp.eq.s32.totalorder %s34, 1
      %p195 = por %p193, %p194
      %p196 = scmp.ne.s32.totalorder %s187, %s188
      %p197 = scmp.eq.s32.totalorder %s34, 0
      %p198 = por %p196, %p197
      %p199 = scmp.ne.s32.totalorder %s187, %s188
      %p200 = scmp.eq.s32.totalorder %s35, 1
      %p201 = por %p199, %p200
      %p203 = scmp.ne.s32.totalorder %s188, %s202
      %p204 = scmp.eq.s32.totalorder %s35, 0
      %p205 = por %p203, %p204
      %s207 = sadd.s32 %s206, 1
      %p210 = scmp.eq.s32.totalorder %s29, 1
      %p211 = scmp.ne.s32.totalorder %s206, %s208
      %p212 = scmp.eq.s32.totalorder %s29, 0
      %p213 = por %p211, %p212
      %p214 = scmp.ne.s32.totalorder %s206, %s208
      %p215 = scmp.eq.s32.totalorder %s34, 1
      %p216 = por %p214, %p215
      %p217 = scmp.ne.s32.totalorder %s208, %s209
      %p218 = scmp.eq.s32.totalorder %s34, 0
      %p219 = por %p217, %p218
      %p220 = scmp.ne.s32.totalorder %s208, %s209
      %p221 = scmp.eq.s32.totalorder %s35, 1
      %p222 = por %p220, %p221
      %p224 = scmp.ne.s32.totalorder %s209, %s223
      %p225 = scmp.eq.s32.totalorder %s35, 0
      %p226 = por %p224, %p225
      %s228 = sadd.s32 %s227, 1
      %p231 = scmp.eq.s32.totalorder %s29, 1
      %p232 = scmp.ne.s32.totalorder %s227, %s229
      %p233 = scmp.eq.s32.totalorder %s29, 0
      %p234 = por %p232, %p233
      %p235 = scmp.ne.s32.totalorder %s227, %s229
      %p236 = scmp.eq.s32.totalorder %s34, 1
      %p237 = por %p235, %p236
      %p238 = scmp.ne.s32.totalorder %s229, %s230
      %p239 = scmp.eq.s32.totalorder %s34, 0
      %p240 = por %p238, %p239
      %p241 = scmp.ne.s32.totalorder %s229, %s230
      %p242 = scmp.eq.s32.totalorder %s35, 1
      %p243 = por %p241, %p242
      %p245 = scmp.ne.s32.totalorder %s230, %s244
      %p246 = scmp.eq.s32.totalorder %s35, 0
      %p247 = por %p245, %p246
      %s249 = sadd.s32 %s248, 1
      %p252 = scmp.eq.s32.totalorder %s29, 1
      %p253 = scmp.ne.s32.totalorder %s248, %s250
      %p254 = scmp.eq.s32.totalorder %s29, 0
      %p255 = por %p253, %p254
      %p256 = scmp.ne.s32.totalorder %s248, %s250
      %p257 = scmp.eq.s32.totalorder %s34, 1
      %p258 = por %p256, %p257
      %p259 = scmp.ne.s32.totalorder %s250, %s251
      %p260 = scmp.eq.s32.totalorder %s34, 0
      %p261 = por %p259, %p260
      %p262 = scmp.ne.s32.totalorder %s250, %s251
      %p263 = scmp.eq.s32.totalorder %s35, 1
      %p264 = por %p262, %p263
      %p266 = scmp.ne.s32.totalorder %s251, %s265
      %p267 = scmp.eq.s32.totalorder %s35, 0
      %p268 = por %p266, %p267
      %s270 = sadd.s32 %s269, 1
      %p273 = scmp.eq.s32.totalorder %s29, 1
      %p274 = scmp.ne.s32.totalorder %s269, %s271
      %p275 = scmp.eq.s32.totalorder %s29, 0
      %p276 = por %p274, %p275
      %p277 = scmp.ne.s32.totalorder %s269, %s271
      %p278 = scmp.eq.s32.totalorder %s34, 1
      %p279 = por %p277, %p278
      %p280 = scmp.ne.s32.totalorder %s271, %s272
      %p281 = scmp.eq.s32.totalorder %s34, 0
      %p282 = por %p280, %p281
      %p283 = scmp.ne.s32.totalorder %s271, %s272
      %p284 = scmp.eq.s32.totalorder %s35, 1
      %p285 = por %p283, %p284
      %p287 = scmp.ne.s32.totalorder %s272, %s286
      %p288 = scmp.eq.s32.totalorder %s35, 0
      %p289 = por %p287, %p288
      %s291 = sadd.s32 %s290, 1
      %p294 = scmp.eq.s32.totalorder %s29, 1
      %p295 = scmp.ne.s32.totalorder %s290, %s292
      %p296 = scmp.eq.s32.totalorder %s29, 0
      %p297 = por %p295, %p296
      %p298 = scmp.ne.s32.totalorder %s290, %s292
      %p299 = scmp.eq.s32.totalorder %s34, 1
      %p300 = por %p298, %p299
      %p301 = scmp.ne.s32.totalorder %s292, %s293
      %p302 = scmp.eq.s32.totalorder %s34, 0
      %p303 = por %p301, %p302
      %p304 = scmp.ne.s32.totalorder %s292, %s293
      %p305 = scmp.eq.s32.totalorder %s35, 1
      %p306 = por %p304, %p305
      %p308 = scmp.ne.s32.totalorder %s293, %s307
      %p309 = scmp.eq.s32.totalorder %s35, 0
      %p310 = por %p308, %p309
      %s311 = ssub.s32 %s36, %s48
      %s312 = ssub.s32 %s37, %s44
      %s313 = sor.u32 %s311, %s312
      %p314 = scmp.eq.s32.totalorder %s313, 0
      %s316 = sadd.s32 %s315, 1
      %s317 = scalar_select %p314, %s315, %s316
      %p320 = pneg %p314
      %p321 = scmp.eq.s32.totalorder %s29, 1
      %p322 = por %p320, %p321
      %p323 = scmp.ne.s32.totalorder %s315, %s318
      %p324 = scmp.eq.s32.totalorder %s29, 0
      %p325 = por %p323, %p324
      %p326 = scmp.ne.s32.totalorder %s315, %s318
      %p327 = scmp.eq.s32.totalorder %s34, 1
      %p328 = por %p326, %p327
      %p329 = scmp.ne.s32.totalorder %s318, %s319
      %p330 = scmp.eq.s32.totalorder %s34, 0
      %p331 = por %p329, %p330
      %p332 = scmp.ne.s32.totalorder %s318, %s319
      %p333 = scmp.eq.s32.totalorder %s35, 1
      %p334 = por %p332, %p333
      %p336 = scmp.ne.s32.totalorder %s319, %s335
      %p337 = scmp.eq.s32.totalorder %s35, 0
      %p338 = por %p336, %p337
      %p339 = scmp.le.s32.totalorder 1, %s29
      %p340 = scmp.lt.s32.totalorder %s29, 3
      %p341 = pnand %p339, %p340
      %p342 = pneg %p341
      // Predicated region
      $region9: #{tpu_custom_call.1} parent=5 // pred_check
        _
      $region10: #{tpu_custom_call.1} parent=5 // pred_check_branch
        %344 = sbr.rel (%p341) target = $region12
      $region11: #{tpu_custom_call.1} parent=5 // pred_region
        %s345 = ssub.s32 %s29, 1
        // Predicated region
        $region13: #{tpu_custom_call.1} parent=11 // pred_check
          %p346 = pneg %p114
        $region14: #{tpu_custom_call.1} parent=11 // pred_check_branch
          %348 = sbr.rel (%p346) target = $region16
        $region15: #{tpu_custom_call.1} parent=11 // pred_region
          %350 = vsyncadd [#allocation9], 0
          %s351 = sshll.u32 %s2, 4
          %s352 = int_to_ptr.hbm [resolvable:$true] %s351
          %s353 = sshll.u32 [#allocation10], 4
          %s354 = int_to_ptr.vmem [resolvable:$true] %s353
          %359 = dma.hbm_to_vmem [thread:$0]  %s352, 256, %s354, [#allocation9], 64, 64, 4
        $region16: #{tpu_custom_call.1} parent=11 // pred_fallthru
          _
        // Predicated region
        $region17: #{tpu_custom_call.1} parent=11 // pred_check
          %p360 = pneg %p135
        $region18: #{tpu_custom_call.1} parent=11 // pred_check_branch
          %362 = sbr.rel (%p360) target = $region20
        $region19: #{tpu_custom_call.1} parent=11 // pred_region
          _
        $region20: #{tpu_custom_call.1} parent=11 // pred_fallthru
          _
        // Predicated region
        $region21: #{tpu_custom_call.1} parent=11 // pred_check
          %p363 = pneg %p156
        $region22: #{tpu_custom_call.1} parent=11 // pred_check_branch
          %365 = sbr.rel (%p363) target = $region24
        $region23: #{tpu_custom_call.1} parent=11 // pred_region
          %367 = vsyncadd [#allocation12], 0
          %s368 = sshll.u32 %s4, 4
          %s369 = int_to_ptr.hbm [resolvable:$true] %s368
          %s370 = sshll.u32 [#allocation11], 4
          %s371 = int_to_ptr.vmem [resolvable:$true] %s370
          %376 = dma.hbm_to_vmem [thread:$0]  %s369, 256, %s371, [#allocation12], 64, 64, 4
        $region24: #{tpu_custom_call.1} parent=11 // pred_fallthru
          _
        // Predicated region
        $region25: #{tpu_custom_call.1} parent=11 // pred_check
          %p377 = pneg %p177
        $region26: #{tpu_custom_call.1} parent=11 // pred_check_branch
          %379 = sbr.rel (%p377) target = $region28
        $region27: #{tpu_custom_call.1} parent=11 // pred_region
          _
        $region28: #{tpu_custom_call.1} parent=11 // pred_fallthru
          _
        // Predicated region
        $region29: #{tpu_custom_call.1} parent=11 // pred_check
          %p380 = pneg %p198
        $region30: #{tpu_custom_call.1} parent=11 // pred_check_branch
          %382 = sbr.rel (%p380) target = $region32
        $region31: #{tpu_custom_call.1} parent=11 // pred_region
          %384 = vsyncadd [#allocation12], 0
          %s385 = sshll.u32 %s6, 4
          %s386 = int_to_ptr.hbm [resolvable:$true] %s385
          %s387 = sshll.u32 [#allocation13], 4
          %s388 = int_to_ptr.vmem [resolvable:$true] %s387
          %393 = dma.hbm_to_vmem [thread:$0]  %s386, 256, %s388, [#allocation12], 64, 64, 4
        $region32: #{tpu_custom_call.1} parent=11 // pred_fallthru
          _
        // Predicated region
        $region33: #{tpu_custom_call.1} parent=11 // pred_check
          %p394 = pneg %p219
        $region34: #{tpu_custom_call.1} parent=11 // pred_check_branch
          %396 = sbr.rel (%p394) target = $region36
        $region35: #{tpu_custom_call.1} parent=11 // pred_region
          _
        $region36: #{tpu_custom_call.1} parent=11 // pred_fallthru
          _
        // Predicated region
        $region37: #{tpu_custom_call.1} parent=11 // pred_check
          %p397 = pneg %p240
        $region38: #{tpu_custom_call.1} parent=11 // pred_check_branch
          %399 = sbr.rel (%p397) target = $region40
        $region39: #{tpu_custom_call.1} parent=11 // pred_region
          %401 = vsyncadd [#allocation15], 0
          %s402 = sshll.u32 %s8, 4
          %s403 = int_to_ptr.hbm [resolvable:$true] %s402
          %s404 = sshll.u32 [#allocation14], 4
          %s405 = int_to_ptr.vmem [resolvable:$true] %s404
          %410 = dma.hbm_to_vmem [thread:$0]  %s403, 256, %s405, [#allocation15], 64, 64, 4
        $region40: #{tpu_custom_call.1} parent=11 // pred_fallthru
          _
        // Predicated region
        $region41: #{tpu_custom_call.1} parent=11 // pred_check
          %p411 = pneg %p261
        $region42: #{tpu_custom_call.1} parent=11 // pred_check_branch
          %413 = sbr.rel (%p411) target = $region44
        $region43: #{tpu_custom_call.1} parent=11 // pred_region
          _
        $region44: #{tpu_custom_call.1} parent=11 // pred_fallthru
          _
        // Predicated region
        $region45: #{tpu_custom_call.1} parent=11 // pred_check
          %p414 = pneg %p282
        $region46: #{tpu_custom_call.1} parent=11 // pred_check_branch
          %416 = sbr.rel (%p414) target = $region48
        $region47: #{tpu_custom_call.1} parent=11 // pred_region
          _
        $region48: #{tpu_custom_call.1} parent=11 // pred_fallthru
          _
        // Predicated region
        $region49: #{tpu_custom_call.1} parent=11 // pred_check
          %p417 = pneg %p303
        $region50: #{tpu_custom_call.1} parent=11 // pred_check_branch
          %419 = sbr.rel (%p417) target = $region52
        $region51: #{tpu_custom_call.1} parent=11 // pred_region
          _
        $region52: #{tpu_custom_call.1} parent=11 // pred_fallthru
          _
      $region12: #{tpu_custom_call.1} parent=5 // pred_fallthru
        _
      %p420 = scmp.lt.s32.totalorder %s29, 2
      // Predicated region
      $region53: #{tpu_custom_call.1} parent=5 // pred_check
        %p421 = pneg %p420
      $region54: #{tpu_custom_call.1} parent=5 // pred_check_branch
        %423 = sbr.rel (%p421) target = $region56
      $region55: #{tpu_custom_call.1} parent=5 // pred_region
        // Predicated region
        $region57: #{tpu_custom_call.1} parent=55 // pred_check
          %p424 = pneg %p61
        $region58: #{tpu_custom_call.1} parent=55 // pred_check_branch
          %426 = sbr.rel (%p424) target = $region60
        $region59: #{tpu_custom_call.1} parent=55 // pred_region
          %s427 = sand.u32 %s51, 1
          %s428 = scalar_lea.sflag [#allocation6], %s427
          %s429 = sand.u32 %s51, 1
          %s430 = smul.addr %s429, 8
          %s431 = scalar_lea.vmem [#allocation5], %s430
          %433 = vsyncadd %s428, 0
          %s434 = smul.addr %s36, 8
          %s435 = scalar_lea.hbm %s0, %s434
          %s437 = sshll.u32 %s435, 4
          %s438 = int_to_ptr.hbm [resolvable:$true] %s437
          %s439 = sshll.u32 %s431, 4
          %s440 = int_to_ptr.vmem [resolvable:$true] %s439
          %442 = dma.hbm_to_vmem [thread:$0]  %s438, 128, %s440, %s428
        $region60: #{tpu_custom_call.1} parent=55 // pred_fallthru
          _
        // Predicated region
        $region61: #{tpu_custom_call.1} parent=55 // pred_check
          %p443 = pneg %p87
        $region62: #{tpu_custom_call.1} parent=55 // pred_check_branch
          %445 = sbr.rel (%p443) target = $region64
        $region63: #{tpu_custom_call.1} parent=55 // pred_region
          %s446 = sand.u32 %s29, 1
          %s447 = scalar_lea.sflag [#allocation9], %s446
          %s448 = sand.u32 %s77, 1
          %s449 = scalar_lea.vmem [#allocation8], %s448
          %451 = vsyncadd %s447, 0
          %s452 = scalar_lea.hbm %s1, %s36
          %s454 = sshll.u32 %s452, 4
          %s455 = int_to_ptr.hbm [resolvable:$true] %s454
          %s456 = sshll.u32 %s449, 4
          %s457 = int_to_ptr.vmem [resolvable:$true] %s456
          %459 = dma.hbm_to_vmem [thread:$0]  %s455, 16, %s457, %s447
        $region64: #{tpu_custom_call.1} parent=55 // pred_fallthru
          _
      $region56: #{tpu_custom_call.1} parent=5 // pred_fallthru
        _
      %p460 = scmp.le.s32.totalorder 1, %s29
      %p461 = scmp.lt.s32.totalorder %s29, 3
      %p462 = pnand %p460, %p461
      %p463 = pneg %p462
      // Predicated region
      $region65: #{tpu_custom_call.1} parent=5 // pred_check
        _
      $region66: #{tpu_custom_call.1} parent=5 // pred_check_branch
        %465 = sbr.rel (%p462) target = $region68
      $region67: #{tpu_custom_call.1} parent=5 // pred_region
        %s466 = ssub.s32 %s29, 1
        %s467 = sand.u32 %s54, 1
        %s468 = scalar_lea.sflag [#allocation6], %s467
        %s469 = sand.u32 %s54, 1
        %s470 = smul.addr %s469, 8
        %s471 = scalar_lea.vmem [#allocation5], %s470
        // Predicated region
        $region69: #{tpu_custom_call.1} parent=67 // pred_check
          %p472 = pneg %p67
        $region70: #{tpu_custom_call.1} parent=67 // pred_check_branch
          %474 = sbr.rel (%p472) target = $region72
        $region71: #{tpu_custom_call.1} parent=67 // pred_region
          %476 = dma.done %s468, 128
        $region72: #{tpu_custom_call.1} parent=67 // pred_fallthru
          _
        %s477 = sand.u32 %s34, 1
        %s478 = scalar_lea.sflag [#allocation9], %s477
        %s479 = sand.u32 %s80, 1
        %s480 = scalar_lea.vmem [#allocation8], %s479
        // Predicated region
        $region73: #{tpu_custom_call.1} parent=67 // pred_check
          %p481 = pneg %p93
        $region74: #{tpu_custom_call.1} parent=67 // pred_check_branch
          %483 = sbr.rel (%p481) target = $region76
        $region75: #{tpu_custom_call.1} parent=67 // pred_region
          %485 = dma.done %s478, 16
        $region76: #{tpu_custom_call.1} parent=67 // pred_fallthru
          _
        // Predicated region
        $region77: #{tpu_custom_call.1} parent=67 // pred_check
          %p486 = pneg %p114
        $region78: #{tpu_custom_call.1} parent=67 // pred_check_branch
          %488 = sbr.rel (%p486) target = $region80
        $region79: #{tpu_custom_call.1} parent=67 // pred_region
          %490 = dma.done [#allocation9], 256
        $region80: #{tpu_custom_call.1} parent=67 // pred_fallthru
          _
        // Predicated region
        $region81: #{tpu_custom_call.1} parent=67 // pred_check
          %p491 = pneg %p156
        $region82: #{tpu_custom_call.1} parent=67 // pred_check_branch
          %493 = sbr.rel (%p491) target = $region84
        $region83: #{tpu_custom_call.1} parent=67 // pred_region
          %495 = dma.done [#allocation12], 256
        $region84: #{tpu_custom_call.1} parent=67 // pred_fallthru
          _
        // Predicated region
        $region85: #{tpu_custom_call.1} parent=67 // pred_check
          %p496 = pneg %p198
        $region86: #{tpu_custom_call.1} parent=67 // pred_check_branch
          %498 = sbr.rel (%p496) target = $region88
        $region87: #{tpu_custom_call.1} parent=67 // pred_region
          %500 = dma.done [#allocation12], 256
        $region88: #{tpu_custom_call.1} parent=67 // pred_fallthru
          _
        // Predicated region
        $region89: #{tpu_custom_call.1} parent=67 // pred_check
          %p501 = pneg %p240
        $region90: #{tpu_custom_call.1} parent=67 // pred_check_branch
          %503 = sbr.rel (%p501) target = $region92
        $region91: #{tpu_custom_call.1} parent=67 // pred_region
          %505 = dma.done [#allocation15], 256
        $region92: #{tpu_custom_call.1} parent=67 // pred_fallthru
          _
        %s506 = sand.u32 %s54, 1
        %s507 = scalar_lea.sflag [#allocation6], %s506
        %s508 = sand.u32 %s54, 1
        %s509 = smul.addr %s508, 8
        %s510 = scalar_lea.vmem [#allocation5], %s509
        %p511 = pneg %p67
        %p512 = pneg %p64
        %s513 = sand.u32 %s34, 1
        %s514 = scalar_lea.sflag [#allocation9], %s513
        %s515 = sand.u32 %s80, 1
        %s516 = scalar_lea.vmem [#allocation8], %s515
        %p517 = pneg %p93
        %p518 = pneg %p90
        %p519 = pneg %p114
        %p520 = pneg %p111
        %p521 = pneg %p135
        %p522 = pneg %p132
        %p523 = pneg %p156
        %p524 = pneg %p153
        %p525 = pneg %p177
        %p526 = pneg %p174
        %p527 = pneg %p198
        %p528 = pneg %p195
        %p529 = pneg %p219
        %p530 = pneg %p216
        %p531 = pneg %p240
        %p532 = pneg %p237
        %p533 = pneg %p261
        %p534 = pneg %p258
        %p535 = pneg %p282
        %p536 = pneg %p279
        %p537 = pneg %p303
        %p538 = pneg %p300
        %p539 = pneg %p331
        %p540 = pneg %p328
        %s541 = sand.u32 %s318, 1
        %s542 = scalar_lea.sflag [#allocation7], %s541
        %s543 = sand.u32 %s318, 1
        %s544 = smul.addr %s543, 8
        %s545 = scalar_lea.vmem [#allocation16], %s544
        %p547 = scmp.eq.s32.totalorder %s39, 0
        // Predicated region
        $region93: #{tpu_custom_call.1} parent=67 // pred_check
          %p548 = pneg %p547
        $region94: #{tpu_custom_call.1} parent=67 // pred_check_branch
          %550 = sbr.rel (%p548) target = $region96
        $region95: #{tpu_custom_call.1} parent=67 // pred_region
          %v551 = vld [vmem:[%s471] sm:$0xff]
          %v552 = vpack.c.bf16 %v551, %v551
          %v553 = vld [vmem:[#allocation11] sm:$0xf]
          %v554 = vld [vmem:[#allocation11 + $0x4] sm:$0xf]
          %v555 = vld [vmem:[#allocation11 + $0x8] sm:$0xf]
          %v556 = vld [vmem:[#allocation11 + $0xc] sm:$0xf]
          %v557 = vld [vmem:[%s5] sm:$0x1]
          %v559 = vperm.slane %v557, 0
          %v565 = vunpack.c.l.b16 %v553
          %v566 = vunpack.c.l.b16 %v554
          %v567 = vunpack.c.l.b16 %v555
          %v568 = vunpack.c.l.b16 %v556
          %v569 = vpack.c.b16 %v566, %v565
          %v570 = vpack.c.b16 %v568, %v567
          %vm573 = vcmask 261120
          %v575 = vsel %vm573, %v552, 0
          %577 = vmatpush.bf16.msra.mxu0 0
          %578 = vmatpush.bf16.msra.mxu0 0
          %579 = vmatpush.bf16.msra.mxu0 0
          %580 = vmatpush.bf16.msra.mxu0 0
          %581 = vmatpush.bf16.msra.mxu0 0
          %582 = vmatpush.bf16.msra.mxu0 0
          %583 = vmatpush.bf16.msra.mxu0 %v570
          %584 = vmatpush.bf16.msra.mxu0 %v569
          %585 = vmatmul.bf16.gmra.mxu0 %v575
          %v586 = vpop.f32.mrf.mxu0
          %v587 = vadd.f32 %v559, %v586
          %v588 = vpop.f32.mrf.mxu0
          %589 = vdwg.mxu0
          %v590 = vld [vmem:[#allocation13] sm:$0xf]
          %v591 = vld [vmem:[#allocation13 + $0x4] sm:$0xf]
          %v592 = vld [vmem:[#allocation13 + $0x8] sm:$0xf]
          %v593 = vld [vmem:[#allocation13 + $0xc] sm:$0xf]
          %v594 = vld [vmem:[%s7] sm:$0x1]
          %v596 = vperm.slane %v594, 0
          %v602 = vunpack.c.l.b16 %v590
          %v603 = vunpack.c.l.b16 %v591
          %v604 = vunpack.c.l.b16 %v592
          %v605 = vunpack.c.l.b16 %v593
          %v606 = vpack.c.b16 %v603, %v602
          %v607 = vpack.c.b16 %v605, %v604
          %610 = vmatpush.bf16.msra.mxu0 0
          %611 = vmatpush.bf16.msra.mxu0 0
          %612 = vmatpush.bf16.msra.mxu0 0
          %613 = vmatpush.bf16.msra.mxu0 0
          %614 = vmatpush.bf16.msra.mxu0 0
          %615 = vmatpush.bf16.msra.mxu0 0
          %616 = vmatpush.bf16.msra.mxu0 %v607
          %617 = vmatpush.bf16.msra.mxu0 %v606
          %618 = vmatmul.bf16.gmra.mxu0 %v575
          %v619 = vpop.f32.mrf.mxu0
          %v620 = vadd.f32 %v596, %v619
          %v621 = vpop.f32.mrf.mxu0
          %622 = vdwg.mxu0
          %v623 = vpack.c.bf16 %v587, %v587
          %624 = vxpose.xlu0.c.b16.start [1/8] %v623, 128
          %625 = vxpose.xlu0.c.b16.cont [2/8] 0, 128
          %626 = vxpose.xlu0.c.b16.cont [3/8] 0, 128
          %627 = vxpose.xlu0.c.b16.cont [4/8] 0, 128
          %628 = vxpose.xlu0.c.b16.cont [5/8] 0, 128
          %629 = vxpose.xlu0.c.b16.cont [6/8] 0, 128
          %630 = vxpose.xlu0.c.b16.cont [7/8] 0, 128
          %631 = vxpose.xlu0.c.b16.end [8/8] 0, 128
          %v632 = vpop.trf.xlu0
          %v633 = vpop.trf.xlu0
          %v634 = vpop.trf.xlu0
          %v635 = vpop.trf.xlu0
          %v636 = vpop.trf.xlu0
          %v637 = vpop.trf.xlu0
          %v638 = vpop.trf.xlu0
          %v639 = vpop.trf.xlu0
          %v642 = vunpack.c.l.b16 %v632
          %v643 = vunpack.c.h.b16 %v632
          %v644 = vunpack.c.l.b16 %v633
          %v645 = vunpack.c.h.b16 %v633
          %v646 = vpack.c.b16 %v642, %v642
          %v647 = vpack.c.b16 %v643, %v643
          %v648 = vpack.c.b16 %v644, %v644
          %v649 = vpack.c.b16 %v645, %v645
          %vm654 = vcmask 60416
          %655 = vst.msk [vmem:[#allocation2] sm:$0xf] %vm654, %v646
          %656 = vst.msk [vmem:[#allocation2 + $0x4] sm:$0xf] %vm654, %v647
          %657 = vst.msk [vmem:[#allocation2 + $0x8] sm:$0xf] %vm654, %v648
          %658 = vst.msk [vmem:[#allocation2 + $0xc] sm:$0xf] %vm654, %v649
          %v659 = vpack.c.bf16 %v620, %v620
          %vm660 = vcmask 257024
          %661 = vst.msk [vmem:[#allocation3] sm:$0xf] %vm660, %v659
        $region96: #{tpu_custom_call.1} parent=67 // pred_fallthru
          _
        %s662 = smul.u32 %s39, 8
        %s663 = scalar_lea.vmem %s471, %s662 [#allocation5]
        %v664 = vld [vmem:[%s663] sm:$0xff]
        %v665 = vpack.c.bf16 %v664, %v664
        %v666 = vld [vmem:[#allocation10] sm:$0xf]
        %v667 = vld [vmem:[#allocation10 + $0x4] sm:$0xf]
        %v668 = vld [vmem:[#allocation10 + $0x8] sm:$0xf]
        %v669 = vld [vmem:[#allocation10 + $0xc] sm:$0xf]
        %v670 = vld [vmem:[%s3] sm:$0x1]
        %v672 = vperm.slane %v670, 0
        %v678 = vunpack.c.l.b16 %v666
        %v679 = vunpack.c.l.b16 %v667
        %v680 = vunpack.c.l.b16 %v668
        %v681 = vunpack.c.l.b16 %v669
        %v682 = vpack.c.b16 %v679, %v678
        %v683 = vpack.c.b16 %v681, %v680
        %vm686 = vcmask 261120
        %v688 = vsel %vm686, %v665, 0
        %690 = vmatpush.bf16.msra.mxu0 0
        %691 = vmatpush.bf16.msra.mxu0 0
        %692 = vmatpush.bf16.msra.mxu0 0
        %693 = vmatpush.bf16.msra.mxu0 0
        %694 = vmatpush.bf16.msra.mxu0 0
        %695 = vmatpush.bf16.msra.mxu0 0
        %696 = vmatpush.bf16.msra.mxu0 %v683
        %697 = vmatpush.bf16.msra.mxu0 %v682
        %698 = vmatmul.bf16.gmra.mxu0 %v688
        %v699 = vpop.f32.mrf.mxu0
        %v700 = vadd.f32 %v672, %v699
        %v701 = vpop.f32.mrf.mxu0
        %702 = vdwg.mxu0
        %v703 = vpack.c.bf16 %v700, %v700
        %v704 = vld [vmem:[%s480] sm:$0x1]
        %v705 = vld [vmem:[#allocation2] sm:$0xf]
        %v706 = vld [vmem:[#allocation3] sm:$0xf]
        %v708 = vperm.slane %v704, 0
        %vm710 = vcmask 64512
        %v712 = vsel %vm710, %v703, 0
        %vm714 = vcmask 1043456
        %v716 = vsel %vm714, %v705, 0
        %718 = vmatpush.bf16.msra.mxu0 0
        %719 = vmatpush.bf16.msra.mxu0 0
        %720 = vmatpush.bf16.msra.mxu0 0
        %721 = vmatpush.bf16.msra.mxu0 0
        %722 = vmatpush.bf16.msra.mxu0 0
        %723 = vmatpush.bf16.msra.mxu0 0
        %724 = vmatpush.bf16.msra.mxu0 0
        %725 = vmatpush.bf16.msra.mxu0 %v716
        %726 = vmatmul.bf16.gmra.mxu0 %v712
        %v727 = vpop.f32.mrf.mxu0
        %v728 = vadd.f32 %v708, %v727
        %v729 = vpop.f32.mrf.mxu0
        %730 = vdwg.mxu0
        %v731 = vsel %vm710, %v728, -inf
        %732 = vmax.xlane.f32.xlu0 %v731
        %v733 = vpop.xlane.xlu0 %732
        %v734 = vsub.f32 %v728, %v733
        %v735 = vmul.f32 %v734, 1.442695
        %v736 = vpow.pop %v735
        %v737 = vsel %vm710, %v736, 0.0
        %738 = vadd.xlane.f32.xlu0 %v737
        %v739 = vpop.xlane.xlu0 %738
        %v740 = vrcp.pop %v739
        %v741 = vmul.f32 %v736, %v740
        %v742 = vpack.c.bf16 %v741, %v741
        %v744 = vsel %vm710, %v742, 0
        %v747 = vsel %vm714, %v706, 0
        %749 = vmatpush.bf16.msra.mxu0 0
        %750 = vmatpush.bf16.msra.mxu0 0
        %751 = vmatpush.bf16.msra.mxu0 0
        %752 = vmatpush.bf16.msra.mxu0 0
        %753 = vmatpush.bf16.msra.mxu0 0
        %754 = vmatpush.bf16.msra.mxu0 0
        %755 = vmatpush.bf16.msra.mxu0 0
        %756 = vmatpush.bf16.msra.mxu0 %v747
        %757 = vmatmul.bf16.gmra.mxu0 %v744
        %v758 = vpop.f32.mrf.mxu0
        %v759 = vadd.f32 0.0, %v758
        %v760 = vpop.f32.mrf.mxu0
        %761 = vdwg.mxu0
        %762 = vst.msk [vmem:[#allocation4] sm:$0xff] %vm710, %v759
        %v763 = vld [vmem:[#allocation2 + $0x4] sm:$0xf]
        %v764 = vld [vmem:[#allocation3] sm:$0xf]
        %v766 = vunpack.c.l.b16 %v703
        %v767 = vpack.c.b16 %v766, %v766
        %768 = vrot.lane.b32.xlu0 %v767, 120
        %v769 = vpop.permute.xlu0 %768
        %v771 = vsel %vm710, %v769, 0
        %v774 = vsel %vm714, %v763, 0
        %776 = vmatpush.bf16.msra.mxu0 0
        %777 = vmatpush.bf16.msra.mxu0 0
        %778 = vmatpush.bf16.msra.mxu0 0
        %779 = vmatpush.bf16.msra.mxu0 0
        %780 = vmatpush.bf16.msra.mxu0 0
        %781 = vmatpush.bf16.msra.mxu0 0
        %782 = vmatpush.bf16.msra.mxu0 0
        %783 = vmatpush.bf16.msra.mxu0 %v774
        %784 = vmatmul.bf16.gmra.mxu0 %v771
        %v785 = vpop.f32.mrf.mxu0
        %v786 = vadd.f32 %v708, %v785
        %v787 = vpop.f32.mrf.mxu0
        %788 = vdwg.mxu0
        %v789 = vsel %vm710, %v786, -inf
        %790 = vmax.xlane.f32.xlu0 %v789
        %v791 = vpop.xlane.xlu0 %790
        %v792 = vsub.f32 %v786, %v791
        %v793 = vmul.f32 %v792, 1.442695
        %v794 = vpow.pop %v793
        %v795 = vsel %vm710, %v794, 0.0
        %796 = vadd.xlane.f32.xlu0 %v795
        %v797 = vpop.xlane.xlu0 %796
        %v798 = vrcp.pop %v797
        %v799 = vmul.f32 %v794, %v798
        %v800 = vpack.c.bf16 %v799, %v799
        %v802 = vunpack.c.l.b16 %v764
        %v803 = vpack.c.b16 %v802, %v802
        %804 = vrot.lane.b32.xlu0 %v803, 120
        %v805 = vpop.permute.xlu0 %804
        %v807 = vsel %vm710, %v800, 0
        %v810 = vsel %vm714, %v805, 0
        %812 = vmatpush.bf16.msra.mxu0 0
        %813 = vmatpush.bf16.msra.mxu0 0
        %814 = vmatpush.bf16.msra.mxu0 0
        %815 = vmatpush.bf16.msra.mxu0 0
        %816 = vmatpush.bf16.msra.mxu0 0
        %817 = vmatpush.bf16.msra.mxu0 0
        %818 = vmatpush.bf16.msra.mxu0 0
        %819 = vmatpush.bf16.msra.mxu0 %v810
        %820 = vmatmul.bf16.gmra.mxu0 %v807
        %v821 = vpop.f32.mrf.mxu0
        %v822 = vadd.f32 0.0, %v821
        %v823 = vpop.f32.mrf.mxu0
        %824 = vdwg.mxu0
        %826 = vrot.lane.b32.xlu0 %v822, 8
        %v827 = vpop.permute.xlu0 %826
        %vm829 = vcmask 130112
        %830 = vst.msk [vmem:[#allocation4] sm:$0xff] %vm829, %v827
        %v831 = vld [vmem:[#allocation2 + $0x8] sm:$0xf]
        %v832 = vld [vmem:[#allocation3] sm:$0xf]
        %833 = vrot.lane.b32.xlu0 %v767, 112
        %v834 = vpop.permute.xlu0 %833
        %v836 = vsel %vm710, %v834, 0
        %v839 = vsel %vm714, %v831, 0
        %841 = vmatpush.bf16.msra.mxu0 0
        %842 = vmatpush.bf16.msra.mxu0 0
        %843 = vmatpush.bf16.msra.mxu0 0
        %844 = vmatpush.bf16.msra.mxu0 0
        %845 = vmatpush.bf16.msra.mxu0 0
        %846 = vmatpush.bf16.msra.mxu0 0
        %847 = vmatpush.bf16.msra.mxu0 0
        %848 = vmatpush.bf16.msra.mxu0 %v839
        %849 = vmatmul.bf16.gmra.mxu0 %v836
        %v850 = vpop.f32.mrf.mxu0
        %v851 = vadd.f32 %v708, %v850
        %v852 = vpop.f32.mrf.mxu0
        %853 = vdwg.mxu0
        %v854 = vsel %vm710, %v851, -inf
        %855 = vmax.xlane.f32.xlu0 %v854
        %v856 = vpop.xlane.xlu0 %855
        %v857 = vsub.f32 %v851, %v856
        %v858 = vmul.f32 %v857, 1.442695
        %v859 = vpow.pop %v858
        %v860 = vsel %vm710, %v859, 0.0
        %861 = vadd.xlane.f32.xlu0 %v860
        %v862 = vpop.xlane.xlu0 %861
        %v863 = vrcp.pop %v862
        %v864 = vmul.f32 %v859, %v863
        %v865 = vpack.c.bf16 %v864, %v864
        %v867 = vunpack.c.l.b16 %v832
        %v868 = vpack.c.b16 %v867, %v867
        %869 = vrot.lane.b32.xlu0 %v868, 112
        %v870 = vpop.permute.xlu0 %869
        %v872 = vsel %vm710, %v865, 0
        %v875 = vsel %vm714, %v870, 0
        %877 = vmatpush.bf16.msra.mxu0 0
        %878 = vmatpush.bf16.msra.mxu0 0
        %879 = vmatpush.bf16.msra.mxu0 0
        %880 = vmatpush.bf16.msra.mxu0 0
        %881 = vmatpush.bf16.msra.mxu0 0
        %882 = vmatpush.bf16.msra.mxu0 0
        %883 = vmatpush.bf16.msra.mxu0 0
        %884 = vmatpush.bf16.msra.mxu0 %v875
        %885 = vmatmul.bf16.gmra.mxu0 %v872
        %v886 = vpop.f32.mrf.mxu0
        %v887 = vadd.f32 0.0, %v886
        %v888 = vpop.f32.mrf.mxu0
        %889 = vdwg.mxu0
        %891 = vrot.lane.b32.xlu0 %v887, 16
        %v892 = vpop.permute.xlu0 %891
        %vm894 = vcmask 195712
        %895 = vst.msk [vmem:[#allocation4] sm:$0xff] %vm894, %v892
        %v896 = vld [vmem:[#allocation2 + $0xc] sm:$0xf]
        %v897 = vld [vmem:[#allocation3] sm:$0xf]
        %898 = vrot.lane.b32.xlu0 %v767, 104
        %v899 = vpop.permute.xlu0 %898
        %v901 = vsel %vm710, %v899, 0
        %v904 = vsel %vm714, %v896, 0
        %906 = vmatpush.bf16.msra.mxu0 0
        %907 = vmatpush.bf16.msra.mxu0 0
        %908 = vmatpush.bf16.msra.mxu0 0
        %909 = vmatpush.bf16.msra.mxu0 0
        %910 = vmatpush.bf16.msra.mxu0 0
        %911 = vmatpush.bf16.msra.mxu0 0
        %912 = vmatpush.bf16.msra.mxu0 0
        %913 = vmatpush.bf16.msra.mxu0 %v904
        %914 = vmatmul.bf16.gmra.mxu0 %v901
        %v915 = vpop.f32.mrf.mxu0
        %v916 = vadd.f32 %v708, %v915
        %v917 = vpop.f32.mrf.mxu0
        %918 = vdwg.mxu0
        %v919 = vsel %vm710, %v916, -inf
        %920 = vmax.xlane.f32.xlu0 %v919
        %v921 = vpop.xlane.xlu0 %920
        %v922 = vsub.f32 %v916, %v921
        %v923 = vmul.f32 %v922, 1.442695
        %v924 = vpow.pop %v923
        %v925 = vsel %vm710, %v924, 0.0
        %926 = vadd.xlane.f32.xlu0 %v925
        %v927 = vpop.xlane.xlu0 %926
        %v928 = vrcp.pop %v927
        %v929 = vmul.f32 %v924, %v928
        %v930 = vpack.c.bf16 %v929, %v929
        %v932 = vunpack.c.l.b16 %v897
        %v933 = vpack.c.b16 %v932, %v932
        %934 = vrot.lane.b32.xlu0 %v933, 104
        %v935 = vpop.permute.xlu0 %934
        %v937 = vsel %vm710, %v930, 0
        %v940 = vsel %vm714, %v935, 0
        %942 = vmatpush.bf16.msra.mxu0 0
        %943 = vmatpush.bf16.msra.mxu0 0
        %944 = vmatpush.bf16.msra.mxu0 0
        %945 = vmatpush.bf16.msra.mxu0 0
        %946 = vmatpush.bf16.msra.mxu0 0
        %947 = vmatpush.bf16.msra.mxu0 0
        %948 = vmatpush.bf16.msra.mxu0 0
        %949 = vmatpush.bf16.msra.mxu0 %v940
        %950 = vmatmul.bf16.gmra.mxu0 %v937
        %v951 = vpop.f32.mrf.mxu0
        %v952 = vadd.f32 0.0, %v951
        %v953 = vpop.f32.mrf.mxu0
        %954 = vdwg.mxu0
        %956 = vrot.lane.b32.xlu0 %v952, 24
        %v957 = vpop.permute.xlu0 %956
        %vm959 = vcmask 261312
        %960 = vst.msk [vmem:[#allocation4] sm:$0xff] %vm959, %v957
        %v961 = vld [vmem:[#allocation4] sm:$0xff]
        %v962 = vpack.c.bf16 %v961, %v961
        %v963 = vld [vmem:[#allocation14] sm:$0xf]
        %v964 = vld [vmem:[#allocation14 + $0x4] sm:$0xf]
        %v965 = vld [vmem:[#allocation14 + $0x8] sm:$0xf]
        %v966 = vld [vmem:[#allocation14 + $0xc] sm:$0xf]
        %v967 = vld [vmem:[%s9] sm:$0x1]
        %v969 = vperm.slane %v967, 0
        %v975 = vunpack.c.l.b16 %v963
        %v976 = vunpack.c.l.b16 %v964
        %v977 = vunpack.c.l.b16 %v965
        %v978 = vunpack.c.l.b16 %v966
        %v979 = vpack.c.b16 %v976, %v975
        %v980 = vpack.c.b16 %v978, %v977
        %v984 = vsel %vm686, %v962, 0
        %986 = vmatpush.bf16.msra.mxu0 0
        %987 = vmatpush.bf16.msra.mxu0 0
        %988 = vmatpush.bf16.msra.mxu0 0
        %989 = vmatpush.bf16.msra.mxu0 0
        %990 = vmatpush.bf16.msra.mxu0 0
        %991 = vmatpush.bf16.msra.mxu0 0
        %992 = vmatpush.bf16.msra.mxu0 %v980
        %993 = vmatpush.bf16.msra.mxu0 %v979
        %994 = vmatmul.bf16.gmra.mxu0 %v984
        %v995 = vpop.f32.mrf.mxu0
        %v996 = vadd.f32 %v969, %v995
        %v997 = vpop.f32.mrf.mxu0
        %998 = vdwg.mxu0
        %v999 = vadd.f32 %v996, %v664
        %v1000 = vsel %vm686, %v999, 0.0
        %1001 = vadd.xlane.f32.xlu0 %v1000
        %v1002 = vpop.xlane.xlu0 %1001
        %v1003 = vrcp.pop 32.0
        %v1004 = vmul.f32 32.0, %v1003
        %v1005 = vsub.f32 1.0, %v1004
        %v1006 = vmul.f32 %v1003, %v1005
        %v1007 = vadd.f32 %v1003, %v1006
        %vm1008 = vweird.f32 %v1003
        %v1009 = vsel %vm1008, %v1003, %v1007
        %v1010 = vmul.f32 %v1002, %v1009
        %v1011 = vsub.f32 %v999, %v1010
        %v1012 = vmul.f32 %v1011, %v1011
        %v1013 = vsel %vm686, %v1012, 0.0
        %1014 = vadd.xlane.f32.xlu0 %v1013
        %v1015 = vpop.xlane.xlu0 %1014
        %v1016 = vmul.f32 %v1015, %v1009
        %v1017 = vadd.f32 %v1016, 1e-12
        %v1018 = vrsqrt.pop %v1017
        %v1019 = vmul.f32 %v1018, %v1017
        %v1020 = vmul.f32 %v1019, %v1018
        %v1021 = vmul.f32 0.5, %v1020
        %v1022 = vsub.f32 1.5, %v1021
        %v1023 = vmul.f32 %v1018, %v1022
        %vm1024 = vweird.f32 %v1017
        %vm1025 = vweird.f32 %v1018
        %vm1026 = vmor %vm1024, %vm1025
        %v1027 = vsel %vm1026, %v1018, %v1023
        %v1028 = vld [vmem:[%s10] sm:$0x1]
        %v1030 = vperm.slane %v1028, 0
        %v1032 = vmul.f32 %v1027, %v1030
        %v1033 = vmul.f32 %v1011, %v1032
        %v1034 = vld [vmem:[%s11] sm:$0x1]
        %v1036 = vperm.slane %v1034, 0
        %v1038 = vadd.f32 %v1033, %v1036
        %1039 = vst.msk [vmem:[%s545] sm:$0xff] %vm686, %v1038
        %s1040 = sand.u32 %s318, 1
        %s1041 = scalar_lea.sflag [#allocation7], %s1040
        %s1042 = sand.u32 %s318, 1
        %s1043 = smul.addr %s1042, 8
        %s1044 = scalar_lea.vmem [#allocation16], %s1043
        // Predicated region
        $region97: #{tpu_custom_call.1} parent=67 // pred_check
          %p1045 = pneg %p328
        $region98: #{tpu_custom_call.1} parent=67 // pred_check_branch
          %1047 = sbr.rel (%p1045) target = $region100
        $region99: #{tpu_custom_call.1} parent=67 // pred_region
          %1049 = vsyncadd %s1041, 0
          %s1050 = sadd.s32 %s39, %s38
          %s1051 = smul.addr %s1050, 8
          %s1052 = scalar_lea.hbm %s12, %s1051
          %s1054 = sshll.u32 %s1044, 4
          %s1055 = int_to_ptr.vmem [resolvable:$true] %s1054
          %s1056 = sshll.u32 %s1052, 4
          %s1057 = int_to_ptr.hbm [resolvable:$true] %s1056
          %1059 = dma.vmem_to_hbm [thread:$0]  %s1055, 128, %s1057, %s1041
        $region100: #{tpu_custom_call.1} parent=67 // pred_fallthru
          _
      $region68: #{tpu_custom_call.1} parent=5 // pred_fallthru
        _
      %p1060 = scmp.le.s32.totalorder 2, %s29
      // Predicated region
      $region101: #{tpu_custom_call.1} parent=5 // pred_check
        %p1061 = pneg %p1060
      $region102: #{tpu_custom_call.1} parent=5 // pred_check_branch
        %1063 = sbr.rel (%p1061) target = $region104
      $region103: #{tpu_custom_call.1} parent=5 // pred_region
        %s1064 = ssub.s32 %s29, 2
        // Predicated region
        $region105: #{tpu_custom_call.1} parent=103 // pred_check
          %p1065 = pneg %p334
        $region106: #{tpu_custom_call.1} parent=103 // pred_check_branch
          %1067 = sbr.rel (%p1065) target = $region108
        $region107: #{tpu_custom_call.1} parent=103 // pred_region
          %s1068 = sand.u32 %s319, 1
          %s1069 = scalar_lea.sflag [#allocation7], %s1068
          %s1070 = sand.u32 %s319, 1
          %s1071 = smul.addr %s1070, 8
          %s1072 = scalar_lea.vmem [#allocation16], %s1071
          %1074 = dma.done %s1069, 128
        $region108: #{tpu_custom_call.1} parent=103 // pred_fallthru
          _
      $region104: #{tpu_custom_call.1} parent=5 // pred_fallthru
        _
    $region6: #{tpu_custom_call.1} parent=1 // loop_footer
      %s33 = sadd.s32 1, %s29
    $region7: #{tpu_custom_call.1} parent=1 // loop_footer_branch
      %28 = sbr.rel target = $region3
    $region8: #{tpu_custom_call.1} parent=1 // loop_exit
      _
    %1075 = vsyncpa [#allocation6], 1
    %s1076 = scalar_lea.sflag [#allocation6], 1
    %1077 = vsyncpa %s1076, 1
    %1078 = vsyncpa [#allocation9], 1
    %s1079 = scalar_lea.sflag [#allocation9], 1
    %1080 = vsyncpa %s1079, 1
    %1081 = vsyncpa [#allocation12], 1
    %1082 = vsyncpa [#allocation15], 1
    %1083 = vsyncpa [#allocation7], 1
    %s1084 = scalar_lea.sflag [#allocation7], 1
    %1085 = vsyncpa %s1084, 1

</llo_original>
